<compile_context>
chip_gen: v7x
topology: tpu7x:2x2x1
jax: 0.10.0
libtpu: 0.0.40
codegen_flags: <defaults>
</compile_context>

<pallas_src>
import functools

import jax
import jax.numpy as jnp
from jax.experimental import pallas as pl
from jax.experimental.pallas import tpu as pltpu


def conv_lstm_kernel(x3_ref, w3_ref, cb_ref, wih_ref, whh_ref, bl_ref,
                     wfc_ref, bfc_ref, out_ref, gx_ref, *, B, T, Hp, chunk_t):
    # ---- Phase 1a: im2col Conv1d(k=3,p=1) + folded BN(eval) + ReLU for all timesteps ----
    conv = jnp.dot(x3_ref[...], w3_ref[...], preferred_element_type=jnp.float32)
    conv = jnp.maximum(conv + cb_ref[...], 0.0).astype(jnp.bfloat16)      # (T*B, 64)

    w_ih = wih_ref[...]                                                   # bf16 (64, 4*Hp)
    w_hh = whh_ref[...]                                                   # bf16 (Hp, 4*Hp), hoisted
    b_l = bl_ref[...]                                                     # f32  (1, 4*Hp)

    n_chunks = (T + chunk_t - 1) // chunk_t

    def compute_chunk(c):
        # Static row-slice store into the flat (T*B, 4*Hp) scratch (no reshape, tile-aligned).
        r0 = c * chunk_t * B
        r1 = min(T, (c + 1) * chunk_t) * B
        gx_ref[r0:r1, :] = (jnp.dot(conv[r0:r1], w_ih,
                                    preferred_element_type=jnp.float32) + b_l)

    compute_chunk(0)

    # ---- Phase 2: serial LSTM recurrence, fully unrolled; chunk c+1's Phase-1 matmul is
    #      issued before chunk c's recurrence so it can fill the recurrence's bubbles. ----
    h = jnp.zeros((B, Hp), jnp.float32)
    c = jnp.zeros((B, Hp), jnp.float32)

    for ch in range(n_chunks):
        if ch + 1 < n_chunks:
            compute_chunk(ch + 1)
        for t in range(ch * chunk_t, min(T, (ch + 1) * chunk_t)):
            gates = gx_ref[t * B:(t + 1) * B, :] + jnp.dot(
                h.astype(jnp.bfloat16), w_hh, preferred_element_type=jnp.float32)
            sig = jax.nn.sigmoid(gates[:, :3 * Hp])          # i | f | o, 128-lane aligned
            i = sig[:, 0 * Hp:1 * Hp]
            f = sig[:, 1 * Hp:2 * Hp]
            o = sig[:, 2 * Hp:3 * Hp]
            g = jnp.tanh(gates[:, 3 * Hp:])
            c = f * c + i * g
            h = o * jnp.tanh(c)

    # Dropout is identity in eval mode; Linear(H, 1) as elementwise-mul + lane reduction.
    out_ref[...] = (jnp.sum(h * wfc_ref[...], axis=-1, keepdims=True)
                    + bfc_ref[...]).astype(out_ref.dtype)


def init_params(key, input_size=21, hidden_size=64):
    """Deterministic synthetic parameters with PyTorch-default shapes."""
    C, H = input_size, hidden_size
    ks = jax.random.split(key, 10)
    kconv = 1.0 / jnp.sqrt(jnp.float32(C * 3))
    klstm = 1.0 / jnp.sqrt(jnp.float32(H))
    kfc = 1.0 / jnp.sqrt(jnp.float32(H))
    return dict(
        conv_w=jax.random.uniform(ks[0], (H, C, 3), jnp.float32, -kconv, kconv),
        conv_b=jax.random.uniform(ks[1], (H,), jnp.float32, -kconv, kconv),
        gamma=1.0 + 0.1 * jax.random.uniform(ks[2], (H,), jnp.float32, -1.0, 1.0),
        beta=0.1 * jax.random.uniform(ks[3], (H,), jnp.float32, -1.0, 1.0),
        running_mean=jnp.zeros((H,), jnp.float32),
        running_var=jnp.ones((H,), jnp.float32),
        w_ih=jax.random.uniform(ks[4], (4 * H, H), jnp.float32, -klstm, klstm),
        w_hh=jax.random.uniform(ks[5], (4 * H, H), jnp.float32, -klstm, klstm),
        b_ih=jax.random.uniform(ks[6], (4 * H,), jnp.float32, -klstm, klstm),
        b_hh=jax.random.uniform(ks[7], (4 * H,), jnp.float32, -klstm, klstm),
        w_fc=jax.random.uniform(ks[8], (1, H), jnp.float32, -kfc, kfc),
        b_fc=jax.random.uniform(ks[9], (1,), jnp.float32, -kfc, kfc),
    )


def conv_lstm_forward(x, p, eps=1e-5, chunk_t=4):
    """x: (B, T, C_in) float32 — same argument layout as the PyTorch module."""
    B, T, C = x.shape
    H = p["conv_b"].shape[0]
    Hp = 128                       # padded per-gate lane width (gate slices hit vreg boundaries)

    # --- im2col over time (kernel=3, padding=1), time-major rows; pad contraction 3C -> K3 ---
    xpad = jnp.pad(x, ((0, 0), (1, 1), (0, 0)))                           # (B, T+2, C)
    x3 = jnp.concatenate([xpad[:, 0:T], xpad[:, 1:T + 1], xpad[:, 2:T + 2]], axis=-1)
    x3 = jnp.transpose(x3, (1, 0, 2)).reshape(T * B, 3 * C)               # (T*B, 3C)
    K3 = ((3 * C + 7) // 8) * 8                                           # 63 -> 64
    x3 = jnp.pad(x3, ((0, 0), (0, K3 - 3 * C))).astype(jnp.bfloat16)

    # --- fold conv bias + BatchNorm1d(eval) into one (K3, H) weight and (1, H) bias ---
    bn_scale = p["gamma"] / jnp.sqrt(p["running_var"] + eps)              # (H,)
    bn_shift = p["beta"] - p["running_mean"] * bn_scale                   # (H,)
    w3 = jnp.concatenate([p["conv_w"][:, :, k].T for k in range(3)], axis=0)  # (3C, H)
    w3 = w3 * bn_scale[None, :]
    w3 = jnp.pad(w3, ((0, K3 - 3 * C), (0, 0))).astype(jnp.bfloat16)      # (K3, H)
    cb = (p["conv_b"] * bn_scale + bn_shift)[None, :]                     # (1, H) f32

    # --- reorder gates (i,f,g,o) -> (i,f,o,g) and zero-pad each gate H -> Hp lanes, hidden H -> Hp ---
    gate_order = (0, 1, 3, 2)      # slot -> original PyTorch gate index (i, f, o, g)

    def pad_gate_cols(w):          # w: (4H, K) PyTorch layout -> (K, 4*Hp), padded lanes zero
        K = w.shape[1]
        out = jnp.zeros((K, 4 * Hp), jnp.float32)
        for slot, gidx in enumerate(gate_order):
            out = out.at[:, slot * Hp:slot * Hp + H].set(w[gidx * H:(gidx + 1) * H].T)
        return out

    w_ih_p = pad_gate_cols(p["w_ih"]).astype(jnp.bfloat16)                # (H, 4*Hp)
    w_hh_p = jnp.pad(pad_gate_cols(p["w_hh"]), ((0, Hp - H), (0, 0))).astype(jnp.bfloat16)  # (Hp, 4*Hp)

    b_sum = p["b_ih"] + p["b_hh"]
    b_l = jnp.zeros((1, 4 * Hp), jnp.float32)
    for slot, gidx in enumerate(gate_order):
        b_l = b_l.at[0, slot * Hp:slot * Hp + H].set(b_sum[gidx * H:(gidx + 1) * H])

    w_fc = jnp.pad(p["w_fc"], ((0, 0), (0, Hp - H)))                      # (1, Hp) f32
    b_fc = p["b_fc"][None, :]                                             # (1, 1)

    kernel = functools.partial(conv_lstm_kernel, B=B, T=T, Hp=Hp, chunk_t=chunk_t)
    vmem = pl.BlockSpec(memory_space=pltpu.MemorySpace.VMEM)
    return pl.pallas_call(
        kernel,
        out_shape=jax.ShapeDtypeStruct((B, 1), jnp.float32),
        in_specs=[vmem] * 8,
        out_specs=vmem,
        scratch_shapes=[pltpu.VMEM((T * B, 4 * Hp), jnp.float32)],        # flat gates_x (~192 KB)
        compiler_params=pltpu.CompilerParams(vmem_limit_bytes=32 * 1024 * 1024),
    )(x3, w3, cb, w_ih_p, w_hh_p, b_l, w_fc, b_fc)


def reference_forward(x, p, eps=1e-5):
    """Pure-JAX f32 reference with identical (eval-mode) semantics."""
    B, T, C = x.shape
    H = p["conv_b"].shape[0]
    xp = jnp.pad(x, ((0, 0), (1, 1), (0, 0)))
    Wk = jnp.transpose(p["conv_w"], (2, 1, 0))  # (3, C, H)
    conv = sum(jnp.einsum("btc,ch->bth", xp[:, k:k + T, :], Wk[k]) for k in range(3))
    conv = conv + p["conv_b"]
    scale = p["gamma"] / jnp.sqrt(p["running_var"] + eps)
    conv = (conv - p["running_mean"]) * scale + p["beta"]
    conv = jnp.maximum(conv, 0.0)

    def cell(carry, x_t):
        h, c = carry
        gates = x_t @ p["w_ih"].T + h @ p["w_hh"].T + p["b_ih"] + p["b_hh"]
        i, f, g, o = jnp.split(gates, 4, axis=-1)
        i, f, o = jax.nn.sigmoid(i), jax.nn.sigmoid(f), jax.nn.sigmoid(o)
        g = jnp.tanh(g)
        c = f * c + i * g
        h = o * jnp.tanh(c)
        return (h, c), None

    h0 = jnp.zeros((B, H), jnp.float32)
    c0 = jnp.zeros((B, H), jnp.float32)
    (h_last, _), _ = jax.lax.scan(cell, (h0, c0), jnp.transpose(conv, (1, 0, 2)))
    return h_last @ p["w_fc"].T + p["b_fc"]


if __name__ == "__main__":
    B, T, C, H = 8, 12, 21, 64
    key = jax.random.PRNGKey(0)
    pkey, xkey = jax.random.split(key)
    params = init_params(pkey, input_size=C, hidden_size=H)
    x = jax.random.normal(xkey, (B, T, C), jnp.float32)

    out = jax.block_until_ready(conv_lstm_forward(x, params))
    ref = reference_forward(x, params)

    assert out.shape == (B, 1), out.shape
    # MXU operands are bf16 (f32 accumulation / f32 state), so tolerance is relaxed vs. pure f32.
    max_err = float(jnp.max(jnp.abs(out - ref)))
    assert max_err < 5e-2, f"max abs error {max_err}"
    print("KERNEL_OK")
</pallas_src>

<mosaic_0001>
module attributes {stable_mosaic.version = 11 : i64} {
  func.func @conv_lstm_kernel(%arg0: memref<96x64xbf16, #tpu.memory_space<vmem>>, %arg1: memref<64x64xbf16, #tpu.memory_space<vmem>>, %arg2: memref<1x64xf32, #tpu.memory_space<vmem>>, %arg3: memref<64x512xbf16, #tpu.memory_space<vmem>>, %arg4: memref<128x512xbf16, #tpu.memory_space<vmem>>, %arg5: memref<1x512xf32, #tpu.memory_space<vmem>>, %arg6: memref<1x128xf32, #tpu.memory_space<vmem>>, %arg7: memref<1x1xf32, #tpu.memory_space<vmem>>, %arg8: memref<8x1xf32, #tpu.memory_space<vmem>>, %arg9: memref<96x512xf32, #tpu.memory_space<vmem>>) attributes {dimension_semantics = [], scalar_prefetch = 0 : i64, scratch_operands = 1 : i64, tpu.core_type = #tpu.core_type<tc>} {
    %c0 = arith.constant 0 : index
    %c0_0 = arith.constant 0 : index
    %0 = vector.load %arg0[%c0, %c0_0] : memref<96x64xbf16, #tpu.memory_space<vmem>>, vector<96x64xbf16>
    %c0_1 = arith.constant 0 : index
    %c0_2 = arith.constant 0 : index
    %1 = vector.load %arg1[%c0_1, %c0_2] : memref<64x64xbf16, #tpu.memory_space<vmem>>, vector<64x64xbf16>
    %cst = arith.constant dense<0.000000e+00> : vector<96x64xf32>
    %2 = tpu.matmul %0, %1, %cst {dimension_numbers = #tpu.dot_dimension_numbers<[1], [0], [0], [1], [0, 0, 1, 1], [], []>} : vector<96x64xbf16>, vector<64x64xbf16>, vector<96x64xf32> -> vector<96x64xf32>
    %c0_3 = arith.constant 0 : index
    %c0_4 = arith.constant 0 : index
    %3 = vector.load %arg2[%c0_3, %c0_4] : memref<1x64xf32, #tpu.memory_space<vmem>>, vector<1x64xf32>
    %4 = vector.broadcast %3 : vector<1x64xf32> to vector<96x64xf32>
    %5 = arith.addf %2, %4 : vector<96x64xf32>
    %cst_5 = arith.constant 0.000000e+00 : f32
    %6 = vector.broadcast %cst_5 : f32 to vector<96x64xf32>
    %7 = arith.maximumf %5, %6 : vector<96x64xf32>
    %8 = arith.truncf %7 : vector<96x64xf32> to vector<96x64xbf16>
    %c0_6 = arith.constant 0 : index
    %c0_7 = arith.constant 0 : index
    %9 = vector.load %arg3[%c0_6, %c0_7] : memref<64x512xbf16, #tpu.memory_space<vmem>>, vector<64x512xbf16>
    %c0_8 = arith.constant 0 : index
    %c0_9 = arith.constant 0 : index
    %10 = vector.load %arg4[%c0_8, %c0_9] : memref<128x512xbf16, #tpu.memory_space<vmem>>, vector<128x512xbf16>
    %c0_10 = arith.constant 0 : index
    %c0_11 = arith.constant 0 : index
    %11 = vector.load %arg5[%c0_10, %c0_11] : memref<1x512xf32, #tpu.memory_space<vmem>>, vector<1x512xf32>
    %12 = vector.extract_strided_slice %8 {offsets = [0, 0], sizes = [32, 64], strides = [1, 1]} : vector<96x64xbf16> to vector<32x64xbf16>
    %cst_12 = arith.constant dense<0.000000e+00> : vector<32x512xf32>
    %13 = tpu.matmul %12, %9, %cst_12 {dimension_numbers = #tpu.dot_dimension_numbers<[1], [0], [0], [1], [0, 0, 1, 1], [], []>} : vector<32x64xbf16>, vector<64x512xbf16>, vector<32x512xf32> -> vector<32x512xf32>
    %14 = vector.broadcast %11 : vector<1x512xf32> to vector<32x512xf32>
    %15 = arith.addf %13, %14 : vector<32x512xf32>
    %c0_13 = arith.constant 0 : index
    %c0_14 = arith.constant 0 : index
    %16 = vector.load %arg9[%c0_13, %c0_14] : memref<96x512xf32, #tpu.memory_space<vmem>>, vector<32x512xf32>
    tpu.vector_store %arg9[%c0_13, %c0_14], %15 {strides = array<i32>} : memref<96x512xf32, #tpu.memory_space<vmem>>, vector<32x512xf32>,
    %cst_15 = arith.constant 0.000000e+00 : f32
    %17 = vector.broadcast %cst_15 : f32 to vector<8x128xf32>
    %cst_16 = arith.constant 0.000000e+00 : f32
    %18 = vector.broadcast %cst_16 : f32 to vector<8x128xf32>
    %19 = vector.extract_strided_slice %8 {offsets = [32, 0], sizes = [32, 64], strides = [1, 1]} : vector<96x64xbf16> to vector<32x64xbf16>
    %cst_17 = arith.constant dense<0.000000e+00> : vector<32x512xf32>
    %20 = tpu.matmul %19, %9, %cst_17 {dimension_numbers = #tpu.dot_dimension_numbers<[1], [0], [0], [1], [0, 0, 1, 1], [], []>} : vector<32x64xbf16>, vector<64x512xbf16>, vector<32x512xf32> -> vector<32x512xf32>
    %21 = vector.broadcast %11 : vector<1x512xf32> to vector<32x512xf32>
    %22 = arith.addf %20, %21 : vector<32x512xf32>
    %c32 = arith.constant 32 : index
    %c0_18 = arith.constant 0 : index
    %23 = vector.load %arg9[%c32, %c0_18] : memref<96x512xf32, #tpu.memory_space<vmem>>, vector<32x512xf32>
    tpu.vector_store %arg9[%c32, %c0_18], %22 {strides = array<i32>} : memref<96x512xf32, #tpu.memory_space<vmem>>, vector<32x512xf32>,
    %c0_19 = arith.constant 0 : index
    %c0_20 = arith.constant 0 : index
    %24 = vector.load %arg9[%c0_19, %c0_20] : memref<96x512xf32, #tpu.memory_space<vmem>>, vector<8x512xf32>
    %25 = arith.truncf %17 : vector<8x128xf32> to vector<8x128xbf16>
    %cst_21 = arith.constant dense<0.000000e+00> : vector<8x512xf32>
    %26 = tpu.matmul %25, %10, %cst_21 {dimension_numbers = #tpu.dot_dimension_numbers<[1], [0], [0], [1], [0, 0, 1, 1], [], []>} : vector<8x128xbf16>, vector<128x512xbf16>, vector<8x512xf32> -> vector<8x512xf32>
    %27 = arith.addf %24, %26 : vector<8x512xf32>
    %28 = vector.extract_strided_slice %27 {offsets = [0, 0], sizes = [8, 384], strides = [1, 1]} : vector<8x512xf32> to vector<8x384xf32>
    %29 = arith.negf %28 : vector<8x384xf32>
    %30 = math.exp %29 : vector<8x384xf32>
    %cst_22 = arith.constant 1.000000e+00 : f32
    %31 = vector.broadcast %cst_22 : f32 to vector<8x384xf32>
    %32 = arith.addf %31, %30 : vector<8x384xf32>
    %33 = arith.divf %31, %32 : vector<8x384xf32>
    %34 = vector.extract_strided_slice %33 {offsets = [0, 0], sizes = [8, 128], strides = [1, 1]} : vector<8x384xf32> to vector<8x128xf32>
    %35 = vector.extract_strided_slice %33 {offsets = [0, 128], sizes = [8, 128], strides = [1, 1]} : vector<8x384xf32> to vector<8x128xf32>
    %36 = vector.extract_strided_slice %33 {offsets = [0, 256], sizes = [8, 128], strides = [1, 1]} : vector<8x384xf32> to vector<8x128xf32>
    %37 = vector.extract_strided_slice %27 {offsets = [0, 384], sizes = [8, 128], strides = [1, 1]} : vector<8x512xf32> to vector<8x128xf32>
    %38 = math.tanh %37 : vector<8x128xf32>
    %39 = arith.mulf %35, %18 : vector<8x128xf32>
    %40 = arith.mulf %34, %38 : vector<8x128xf32>
    %41 = arith.addf %39, %40 : vector<8x128xf32>
    %42 = math.tanh %41 : vector<8x128xf32>
    %43 = arith.mulf %36, %42 : vector<8x128xf32>
    %c8 = arith.constant 8 : index
    %c0_23 = arith.constant 0 : index
    %44 = vector.load %arg9[%c8, %c0_23] : memref<96x512xf32, #tpu.memory_space<vmem>>, vector<8x512xf32>
    %45 = arith.truncf %43 : vector<8x128xf32> to vector<8x128xbf16>
    %cst_24 = arith.constant dense<0.000000e+00> : vector<8x512xf32>
    %46 = tpu.matmul %45, %10, %cst_24 {dimension_numbers = #tpu.dot_dimension_numbers<[1], [0], [0], [1], [0, 0, 1, 1], [], []>} : vector<8x128xbf16>, vector<128x512xbf16>, vector<8x512xf32> -> vector<8x512xf32>
    %47 = arith.addf %44, %46 : vector<8x512xf32>
    %48 = vector.extract_strided_slice %47 {offsets = [0, 0], sizes = [8, 384], strides = [1, 1]} : vector<8x512xf32> to vector<8x384xf32>
    %49 = arith.negf %48 : vector<8x384xf32>
    %50 = math.exp %49 : vector<8x384xf32>
    %cst_25 = arith.constant 1.000000e+00 : f32
    %51 = vector.broadcast %cst_25 : f32 to vector<8x384xf32>
    %52 = arith.addf %51, %50 : vector<8x384xf32>
    %53 = arith.divf %51, %52 : vector<8x384xf32>
    %54 = vector.extract_strided_slice %53 {offsets = [0, 0], sizes = [8, 128], strides = [1, 1]} : vector<8x384xf32> to vector<8x128xf32>
    %55 = vector.extract_strided_slice %53 {offsets = [0, 128], sizes = [8, 128], strides = [1, 1]} : vector<8x384xf32> to vector<8x128xf32>
    %56 = vector.extract_strided_slice %53 {offsets = [0, 256], sizes = [8, 128], strides = [1, 1]} : vector<8x384xf32> to vector<8x128xf32>
    %57 = vector.extract_strided_slice %47 {offsets = [0, 384], sizes = [8, 128], strides = [1, 1]} : vector<8x512xf32> to vector<8x128xf32>
    %58 = math.tanh %57 : vector<8x128xf32>
    %59 = arith.mulf %55, %41 : vector<8x128xf32>
    %60 = arith.mulf %54, %58 : vector<8x128xf32>
    %61 = arith.addf %59, %60 : vector<8x128xf32>
    %62 = math.tanh %61 : vector<8x128xf32>
    %63 = arith.mulf %56, %62 : vector<8x128xf32>
    %c16 = arith.constant 16 : index
    %c0_26 = arith.constant 0 : index
    %64 = vector.load %arg9[%c16, %c0_26] : memref<96x512xf32, #tpu.memory_space<vmem>>, vector<8x512xf32>
    %65 = arith.truncf %63 : vector<8x128xf32> to vector<8x128xbf16>
    %cst_27 = arith.constant dense<0.000000e+00> : vector<8x512xf32>
    %66 = tpu.matmul %65, %10, %cst_27 {dimension_numbers = #tpu.dot_dimension_numbers<[1], [0], [0], [1], [0, 0, 1, 1], [], []>} : vector<8x128xbf16>, vector<128x512xbf16>, vector<8x512xf32> -> vector<8x512xf32>
    %67 = arith.addf %64, %66 : vector<8x512xf32>
    %68 = vector.extract_strided_slice %67 {offsets = [0, 0], sizes = [8, 384], strides = [1, 1]} : vector<8x512xf32> to vector<8x384xf32>
    %69 = arith.negf %68 : vector<8x384xf32>
    %70 = math.exp %69 : vector<8x384xf32>
    %cst_28 = arith.constant 1.000000e+00 : f32
    %71 = vector.broadcast %cst_28 : f32 to vector<8x384xf32>
    %72 = arith.addf %71, %70 : vector<8x384xf32>
    %73 = arith.divf %71, %72 : vector<8x384xf32>
    %74 = vector.extract_strided_slice %73 {offsets = [0, 0], sizes = [8, 128], strides = [1, 1]} : vector<8x384xf32> to vector<8x128xf32>
    %75 = vector.extract_strided_slice %73 {offsets = [0, 128], sizes = [8, 128], strides = [1, 1]} : vector<8x384xf32> to vector<8x128xf32>
    %76 = vector.extract_strided_slice %73 {offsets = [0, 256], sizes = [8, 128], strides = [1, 1]} : vector<8x384xf32> to vector<8x128xf32>
    %77 = vector.extract_strided_slice %67 {offsets = [0, 384], sizes = [8, 128], strides = [1, 1]} : vector<8x512xf32> to vector<8x128xf32>
    %78 = math.tanh %77 : vector<8x128xf32>
    %79 = arith.mulf %75, %61 : vector<8x128xf32>
    %80 = arith.mulf %74, %78 : vector<8x128xf32>
    %81 = arith.addf %79, %80 : vector<8x128xf32>
    %82 = math.tanh %81 : vector<8x128xf32>
    %83 = arith.mulf %76, %82 : vector<8x128xf32>
    %c24 = arith.constant 24 : index
    %c0_29 = arith.constant 0 : index
    %84 = vector.load %arg9[%c24, %c0_29] : memref<96x512xf32, #tpu.memory_space<vmem>>, vector<8x512xf32>
    %85 = arith.truncf %83 : vector<8x128xf32> to vector<8x128xbf16>
    %cst_30 = arith.constant dense<0.000000e+00> : vector<8x512xf32>
    %86 = tpu.matmul %85, %10, %cst_30 {dimension_numbers = #tpu.dot_dimension_numbers<[1], [0], [0], [1], [0, 0, 1, 1], [], []>} : vector<8x128xbf16>, vector<128x512xbf16>, vector<8x512xf32> -> vector<8x512xf32>
    %87 = arith.addf %84, %86 : vector<8x512xf32>
    %88 = vector.extract_strided_slice %87 {offsets = [0, 0], sizes = [8, 384], strides = [1, 1]} : vector<8x512xf32> to vector<8x384xf32>
    %89 = arith.negf %88 : vector<8x384xf32>
    %90 = math.exp %89 : vector<8x384xf32>
    %cst_31 = arith.constant 1.000000e+00 : f32
    %91 = vector.broadcast %cst_31 : f32 to vector<8x384xf32>
    %92 = arith.addf %91, %90 : vector<8x384xf32>
    %93 = arith.divf %91, %92 : vector<8x384xf32>
    %94 = vector.extract_strided_slice %93 {offsets = [0, 0], sizes = [8, 128], strides = [1, 1]} : vector<8x384xf32> to vector<8x128xf32>
    %95 = vector.extract_strided_slice %93 {offsets = [0, 128], sizes = [8, 128], strides = [1, 1]} : vector<8x384xf32> to vector<8x128xf32>
    %96 = vector.extract_strided_slice %93 {offsets = [0, 256], sizes = [8, 128], strides = [1, 1]} : vector<8x384xf32> to vector<8x128xf32>
    %97 = vector.extract_strided_slice %87 {offsets = [0, 384], sizes = [8, 128], strides = [1, 1]} : vector<8x512xf32> to vector<8x128xf32>
    %98 = math.tanh %97 : vector<8x128xf32>
    %99 = arith.mulf %95, %81 : vector<8x128xf32>
    %100 = arith.mulf %94, %98 : vector<8x128xf32>
    %101 = arith.addf %99, %100 : vector<8x128xf32>
    %102 = math.tanh %101 : vector<8x128xf32>
    %103 = arith.mulf %96, %102 : vector<8x128xf32>
    %104 = vector.extract_strided_slice %8 {offsets = [64, 0], sizes = [32, 64], strides = [1, 1]} : vector<96x64xbf16> to vector<32x64xbf16>
    %cst_32 = arith.constant dense<0.000000e+00> : vector<32x512xf32>
    %105 = tpu.matmul %104, %9, %cst_32 {dimension_numbers = #tpu.dot_dimension_numbers<[1], [0], [0], [1], [0, 0, 1, 1], [], []>} : vector<32x64xbf16>, vector<64x512xbf16>, vector<32x512xf32> -> vector<32x512xf32>
    %106 = vector.broadcast %11 : vector<1x512xf32> to vector<32x512xf32>
    %107 = arith.addf %105, %106 : vector<32x512xf32>
    %c64 = arith.constant 64 : index
    %c0_33 = arith.constant 0 : index
    %108 = vector.load %arg9[%c64, %c0_33] : memref<96x512xf32, #tpu.memory_space<vmem>>, vector<32x512xf32>
    tpu.vector_store %arg9[%c64, %c0_33], %107 {strides = array<i32>} : memref<96x512xf32, #tpu.memory_space<vmem>>, vector<32x512xf32>,
    %c32_34 = arith.constant 32 : index
    %c0_35 = arith.constant 0 : index
    %109 = vector.load %arg9[%c32_34, %c0_35] : memref<96x512xf32, #tpu.memory_space<vmem>>, vector<8x512xf32>
    %110 = arith.truncf %103 : vector<8x128xf32> to vector<8x128xbf16>
    %cst_36 = arith.constant dense<0.000000e+00> : vector<8x512xf32>
    %111 = tpu.matmul %110, %10, %cst_36 {dimension_numbers = #tpu.dot_dimension_numbers<[1], [0], [0], [1], [0, 0, 1, 1], [], []>} : vector<8x128xbf16>, vector<128x512xbf16>, vector<8x512xf32> -> vector<8x512xf32>
    %112 = arith.addf %109, %111 : vector<8x512xf32>
    %113 = vector.extract_strided_slice %112 {offsets = [0, 0], sizes = [8, 384], strides = [1, 1]} : vector<8x512xf32> to vector<8x384xf32>
    %114 = arith.negf %113 : vector<8x384xf32>
    %115 = math.exp %114 : vector<8x384xf32>
    %cst_37 = arith.constant 1.000000e+00 : f32
    %116 = vector.broadcast %cst_37 : f32 to vector<8x384xf32>
    %117 = arith.addf %116, %115 : vector<8x384xf32>
    %118 = arith.divf %116, %117 : vector<8x384xf32>
    %119 = vector.extract_strided_slice %118 {offsets = [0, 0], sizes = [8, 128], strides = [1, 1]} : vector<8x384xf32> to vector<8x128xf32>
    %120 = vector.extract_strided_slice %118 {offsets = [0, 128], sizes = [8, 128], strides = [1, 1]} : vector<8x384xf32> to vector<8x128xf32>
    %121 = vector.extract_strided_slice %118 {offsets = [0, 256], sizes = [8, 128], strides = [1, 1]} : vector<8x384xf32> to vector<8x128xf32>
    %122 = vector.extract_strided_slice %112 {offsets = [0, 384], sizes = [8, 128], strides = [1, 1]} : vector<8x512xf32> to vector<8x128xf32>
    %123 = math.tanh %122 : vector<8x128xf32>
    %124 = arith.mulf %120, %101 : vector<8x128xf32>
    %125 = arith.mulf %119, %123 : vector<8x128xf32>
    %126 = arith.addf %124, %125 : vector<8x128xf32>
    %127 = math.tanh %126 : vector<8x128xf32>
    %128 = arith.mulf %121, %127 : vector<8x128xf32>
    %c40 = arith.constant 40 : index
    %c0_38 = arith.constant 0 : index
    %129 = vector.load %arg9[%c40, %c0_38] : memref<96x512xf32, #tpu.memory_space<vmem>>, vector<8x512xf32>
    %130 = arith.truncf %128 : vector<8x128xf32> to vector<8x128xbf16>
    %cst_39 = arith.constant dense<0.000000e+00> : vector<8x512xf32>
    %131 = tpu.matmul %130, %10, %cst_39 {dimension_numbers = #tpu.dot_dimension_numbers<[1], [0], [0], [1], [0, 0, 1, 1], [], []>} : vector<8x128xbf16>, vector<128x512xbf16>, vector<8x512xf32> -> vector<8x512xf32>
    %132 = arith.addf %129, %131 : vector<8x512xf32>
    %133 = vector.extract_strided_slice %132 {offsets = [0, 0], sizes = [8, 384], strides = [1, 1]} : vector<8x512xf32> to vector<8x384xf32>
    %134 = arith.negf %133 : vector<8x384xf32>
    %135 = math.exp %134 : vector<8x384xf32>
    %cst_40 = arith.constant 1.000000e+00 : f32
    %136 = vector.broadcast %cst_40 : f32 to vector<8x384xf32>
    %137 = arith.addf %136, %135 : vector<8x384xf32>
    %138 = arith.divf %136, %137 : vector<8x384xf32>
    %139 = vector.extract_strided_slice %138 {offsets = [0, 0], sizes = [8, 128], strides = [1, 1]} : vector<8x384xf32> to vector<8x128xf32>
    %140 = vector.extract_strided_slice %138 {offsets = [0, 128], sizes = [8, 128], strides = [1, 1]} : vector<8x384xf32> to vector<8x128xf32>
    %141 = vector.extract_strided_slice %138 {offsets = [0, 256], sizes = [8, 128], strides = [1, 1]} : vector<8x384xf32> to vector<8x128xf32>
    %142 = vector.extract_strided_slice %132 {offsets = [0, 384], sizes = [8, 128], strides = [1, 1]} : vector<8x512xf32> to vector<8x128xf32>
    %143 = math.tanh %142 : vector<8x128xf32>
    %144 = arith.mulf %140, %126 : vector<8x128xf32>
    %145 = arith.mulf %139, %143 : vector<8x128xf32>
    %146 = arith.addf %144, %145 : vector<8x128xf32>
    %147 = math.tanh %146 : vector<8x128xf32>
    %148 = arith.mulf %141, %147 : vector<8x128xf32>
    %c48 = arith.constant 48 : index
    %c0_41 = arith.constant 0 : index
    %149 = vector.load %arg9[%c48, %c0_41] : memref<96x512xf32, #tpu.memory_space<vmem>>, vector<8x512xf32>
    %150 = arith.truncf %148 : vector<8x128xf32> to vector<8x128xbf16>
    %cst_42 = arith.constant dense<0.000000e+00> : vector<8x512xf32>
    %151 = tpu.matmul %150, %10, %cst_42 {dimension_numbers = #tpu.dot_dimension_numbers<[1], [0], [0], [1], [0, 0, 1, 1], [], []>} : vector<8x128xbf16>, vector<128x512xbf16>, vector<8x512xf32> -> vector<8x512xf32>
    %152 = arith.addf %149, %151 : vector<8x512xf32>
    %153 = vector.extract_strided_slice %152 {offsets = [0, 0], sizes = [8, 384], strides = [1, 1]} : vector<8x512xf32> to vector<8x384xf32>
    %154 = arith.negf %153 : vector<8x384xf32>
    %155 = math.exp %154 : vector<8x384xf32>
    %cst_43 = arith.constant 1.000000e+00 : f32
    %156 = vector.broadcast %cst_43 : f32 to vector<8x384xf32>
    %157 = arith.addf %156, %155 : vector<8x384xf32>
    %158 = arith.divf %156, %157 : vector<8x384xf32>
    %159 = vector.extract_strided_slice %158 {offsets = [0, 0], sizes = [8, 128], strides = [1, 1]} : vector<8x384xf32> to vector<8x128xf32>
    %160 = vector.extract_strided_slice %158 {offsets = [0, 128], sizes = [8, 128], strides = [1, 1]} : vector<8x384xf32> to vector<8x128xf32>
    %161 = vector.extract_strided_slice %158 {offsets = [0, 256], sizes = [8, 128], strides = [1, 1]} : vector<8x384xf32> to vector<8x128xf32>
    %162 = vector.extract_strided_slice %152 {offsets = [0, 384], sizes = [8, 128], strides = [1, 1]} : vector<8x512xf32> to vector<8x128xf32>
    %163 = math.tanh %162 : vector<8x128xf32>
    %164 = arith.mulf %160, %146 : vector<8x128xf32>
    %165 = arith.mulf %159, %163 : vector<8x128xf32>
    %166 = arith.addf %164, %165 : vector<8x128xf32>
    %167 = math.tanh %166 : vector<8x128xf32>
    %168 = arith.mulf %161, %167 : vector<8x128xf32>
    %c56 = arith.constant 56 : index
    %c0_44 = arith.constant 0 : index
    %169 = vector.load %arg9[%c56, %c0_44] : memref<96x512xf32, #tpu.memory_space<vmem>>, vector<8x512xf32>
    %170 = arith.truncf %168 : vector<8x128xf32> to vector<8x128xbf16>
    %cst_45 = arith.constant dense<0.000000e+00> : vector<8x512xf32>
    %171 = tpu.matmul %170, %10, %cst_45 {dimension_numbers = #tpu.dot_dimension_numbers<[1], [0], [0], [1], [0, 0, 1, 1], [], []>} : vector<8x128xbf16>, vector<128x512xbf16>, vector<8x512xf32> -> vector<8x512xf32>
    %172 = arith.addf %169, %171 : vector<8x512xf32>
    %173 = vector.extract_strided_slice %172 {offsets = [0, 0], sizes = [8, 384], strides = [1, 1]} : vector<8x512xf32> to vector<8x384xf32>
    %174 = arith.negf %173 : vector<8x384xf32>
    %175 = math.exp %174 : vector<8x384xf32>
    %cst_46 = arith.constant 1.000000e+00 : f32
    %176 = vector.broadcast %cst_46 : f32 to vector<8x384xf32>
    %177 = arith.addf %176, %175 : vector<8x384xf32>
    %178 = arith.divf %176, %177 : vector<8x384xf32>
    %179 = vector.extract_strided_slice %178 {offsets = [0, 0], sizes = [8, 128], strides = [1, 1]} : vector<8x384xf32> to vector<8x128xf32>
    %180 = vector.extract_strided_slice %178 {offsets = [0, 128], sizes = [8, 128], strides = [1, 1]} : vector<8x384xf32> to vector<8x128xf32>
    %181 = vector.extract_strided_slice %178 {offsets = [0, 256], sizes = [8, 128], strides = [1, 1]} : vector<8x384xf32> to vector<8x128xf32>
    %182 = vector.extract_strided_slice %172 {offsets = [0, 384], sizes = [8, 128], strides = [1, 1]} : vector<8x512xf32> to vector<8x128xf32>
    %183 = math.tanh %182 : vector<8x128xf32>
    %184 = arith.mulf %180, %166 : vector<8x128xf32>
    %185 = arith.mulf %179, %183 : vector<8x128xf32>
    %186 = arith.addf %184, %185 : vector<8x128xf32>
    %187 = math.tanh %186 : vector<8x128xf32>
    %188 = arith.mulf %181, %187 : vector<8x128xf32>
    %c64_47 = arith.constant 64 : index
    %c0_48 = arith.constant 0 : index
    %189 = vector.load %arg9[%c64_47, %c0_48] : memref<96x512xf32, #tpu.memory_space<vmem>>, vector<8x512xf32>
    %190 = arith.truncf %188 : vector<8x128xf32> to vector<8x128xbf16>
    %cst_49 = arith.constant dense<0.000000e+00> : vector<8x512xf32>
    %191 = tpu.matmul %190, %10, %cst_49 {dimension_numbers = #tpu.dot_dimension_numbers<[1], [0], [0], [1], [0, 0, 1, 1], [], []>} : vector<8x128xbf16>, vector<128x512xbf16>, vector<8x512xf32> -> vector<8x512xf32>
    %192 = arith.addf %189, %191 : vector<8x512xf32>
    %193 = vector.extract_strided_slice %192 {offsets = [0, 0], sizes = [8, 384], strides = [1, 1]} : vector<8x512xf32> to vector<8x384xf32>
    %194 = arith.negf %193 : vector<8x384xf32>
    %195 = math.exp %194 : vector<8x384xf32>
    %cst_50 = arith.constant 1.000000e+00 : f32
    %196 = vector.broadcast %cst_50 : f32 to vector<8x384xf32>
    %197 = arith.addf %196, %195 : vector<8x384xf32>
    %198 = arith.divf %196, %197 : vector<8x384xf32>
    %199 = vector.extract_strided_slice %198 {offsets = [0, 0], sizes = [8, 128], strides = [1, 1]} : vector<8x384xf32> to vector<8x128xf32>
    %200 = vector.extract_strided_slice %198 {offsets = [0, 128], sizes = [8, 128], strides = [1, 1]} : vector<8x384xf32> to vector<8x128xf32>
    %201 = vector.extract_strided_slice %198 {offsets = [0, 256], sizes = [8, 128], strides = [1, 1]} : vector<8x384xf32> to vector<8x128xf32>
    %202 = vector.extract_strided_slice %192 {offsets = [0, 384], sizes = [8, 128], strides = [1, 1]} : vector<8x512xf32> to vector<8x128xf32>
    %203 = math.tanh %202 : vector<8x128xf32>
    %204 = arith.mulf %200, %186 : vector<8x128xf32>
    %205 = arith.mulf %199, %203 : vector<8x128xf32>
    %206 = arith.addf %204, %205 : vector<8x128xf32>
    %207 = math.tanh %206 : vector<8x128xf32>
    %208 = arith.mulf %201, %207 : vector<8x128xf32>
    %c72 = arith.constant 72 : index
    %c0_51 = arith.constant 0 : index
    %209 = vector.load %arg9[%c72, %c0_51] : memref<96x512xf32, #tpu.memory_space<vmem>>, vector<8x512xf32>
    %210 = arith.truncf %208 : vector<8x128xf32> to vector<8x128xbf16>
    %cst_52 = arith.constant dense<0.000000e+00> : vector<8x512xf32>
    %211 = tpu.matmul %210, %10, %cst_52 {dimension_numbers = #tpu.dot_dimension_numbers<[1], [0], [0], [1], [0, 0, 1, 1], [], []>} : vector<8x128xbf16>, vector<128x512xbf16>, vector<8x512xf32> -> vector<8x512xf32>
    %212 = arith.addf %209, %211 : vector<8x512xf32>
    %213 = vector.extract_strided_slice %212 {offsets = [0, 0], sizes = [8, 384], strides = [1, 1]} : vector<8x512xf32> to vector<8x384xf32>
    %214 = arith.negf %213 : vector<8x384xf32>
    %215 = math.exp %214 : vector<8x384xf32>
    %cst_53 = arith.constant 1.000000e+00 : f32
    %216 = vector.broadcast %cst_53 : f32 to vector<8x384xf32>
    %217 = arith.addf %216, %215 : vector<8x384xf32>
    %218 = arith.divf %216, %217 : vector<8x384xf32>
    %219 = vector.extract_strided_slice %218 {offsets = [0, 0], sizes = [8, 128], strides = [1, 1]} : vector<8x384xf32> to vector<8x128xf32>
    %220 = vector.extract_strided_slice %218 {offsets = [0, 128], sizes = [8, 128], strides = [1, 1]} : vector<8x384xf32> to vector<8x128xf32>
    %221 = vector.extract_strided_slice %218 {offsets = [0, 256], sizes = [8, 128], strides = [1, 1]} : vector<8x384xf32> to vector<8x128xf32>
    %222 = vector.extract_strided_slice %212 {offsets = [0, 384], sizes = [8, 128], strides = [1, 1]} : vector<8x512xf32> to vector<8x128xf32>
    %223 = math.tanh %222 : vector<8x128xf32>
    %224 = arith.mulf %220, %206 : vector<8x128xf32>
    %225 = arith.mulf %219, %223 : vector<8x128xf32>
    %226 = arith.addf %224, %225 : vector<8x128xf32>
    %227 = math.tanh %226 : vector<8x128xf32>
    %228 = arith.mulf %221, %227 : vector<8x128xf32>
    %c80 = arith.constant 80 : index
    %c0_54 = arith.constant 0 : index
    %229 = vector.load %arg9[%c80, %c0_54] : memref<96x512xf32, #tpu.memory_space<vmem>>, vector<8x512xf32>
    %230 = arith.truncf %228 : vector<8x128xf32> to vector<8x128xbf16>
    %cst_55 = arith.constant dense<0.000000e+00> : vector<8x512xf32>
    %231 = tpu.matmul %230, %10, %cst_55 {dimension_numbers = #tpu.dot_dimension_numbers<[1], [0], [0], [1], [0, 0, 1, 1], [], []>} : vector<8x128xbf16>, vector<128x512xbf16>, vector<8x512xf32> -> vector<8x512xf32>
    %232 = arith.addf %229, %231 : vector<8x512xf32>
    %233 = vector.extract_strided_slice %232 {offsets = [0, 0], sizes = [8, 384], strides = [1, 1]} : vector<8x512xf32> to vector<8x384xf32>
    %234 = arith.negf %233 : vector<8x384xf32>
    %235 = math.exp %234 : vector<8x384xf32>
    %cst_56 = arith.constant 1.000000e+00 : f32
    %236 = vector.broadcast %cst_56 : f32 to vector<8x384xf32>
    %237 = arith.addf %236, %235 : vector<8x384xf32>
    %238 = arith.divf %236, %237 : vector<8x384xf32>
    %239 = vector.extract_strided_slice %238 {offsets = [0, 0], sizes = [8, 128], strides = [1, 1]} : vector<8x384xf32> to vector<8x128xf32>
    %240 = vector.extract_strided_slice %238 {offsets = [0, 128], sizes = [8, 128], strides = [1, 1]} : vector<8x384xf32> to vector<8x128xf32>
    %241 = vector.extract_strided_slice %238 {offsets = [0, 256], sizes = [8, 128], strides = [1, 1]} : vector<8x384xf32> to vector<8x128xf32>
    %242 = vector.extract_strided_slice %232 {offsets = [0, 384], sizes = [8, 128], strides = [1, 1]} : vector<8x512xf32> to vector<8x128xf32>
    %243 = math.tanh %242 : vector<8x128xf32>
    %244 = arith.mulf %240, %226 : vector<8x128xf32>
    %245 = arith.mulf %239, %243 : vector<8x128xf32>
    %246 = arith.addf %244, %245 : vector<8x128xf32>
    %247 = math.tanh %246 : vector<8x128xf32>
    %248 = arith.mulf %241, %247 : vector<8x128xf32>
    %c88 = arith.constant 88 : index
    %c0_57 = arith.constant 0 : index
    %249 = vector.load %arg9[%c88, %c0_57] : memref<96x512xf32, #tpu.memory_space<vmem>>, vector<8x512xf32>
    %250 = arith.truncf %248 : vector<8x128xf32> to vector<8x128xbf16>
    %cst_58 = arith.constant dense<0.000000e+00> : vector<8x512xf32>
    %251 = tpu.matmul %250, %10, %cst_58 {dimension_numbers = #tpu.dot_dimension_numbers<[1], [0], [0], [1], [0, 0, 1, 1], [], []>} : vector<8x128xbf16>, vector<128x512xbf16>, vector<8x512xf32> -> vector<8x512xf32>
    %252 = arith.addf %249, %251 : vector<8x512xf32>
    %253 = vector.extract_strided_slice %252 {offsets = [0, 0], sizes = [8, 384], strides = [1, 1]} : vector<8x512xf32> to vector<8x384xf32>
    %254 = arith.negf %253 : vector<8x384xf32>
    %255 = math.exp %254 : vector<8x384xf32>
    %cst_59 = arith.constant 1.000000e+00 : f32
    %256 = vector.broadcast %cst_59 : f32 to vector<8x384xf32>
    %257 = arith.addf %256, %255 : vector<8x384xf32>
    %258 = arith.divf %256, %257 : vector<8x384xf32>
    %259 = vector.extract_strided_slice %258 {offsets = [0, 0], sizes = [8, 128], strides = [1, 1]} : vector<8x384xf32> to vector<8x128xf32>
    %260 = vector.extract_strided_slice %258 {offsets = [0, 128], sizes = [8, 128], strides = [1, 1]} : vector<8x384xf32> to vector<8x128xf32>
    %261 = vector.extract_strided_slice %258 {offsets = [0, 256], sizes = [8, 128], strides = [1, 1]} : vector<8x384xf32> to vector<8x128xf32>
    %262 = vector.extract_strided_slice %252 {offsets = [0, 384], sizes = [8, 128], strides = [1, 1]} : vector<8x512xf32> to vector<8x128xf32>
    %263 = math.tanh %262 : vector<8x128xf32>
    %264 = arith.mulf %260, %246 : vector<8x128xf32>
    %265 = arith.mulf %259, %263 : vector<8x128xf32>
    %266 = arith.addf %264, %265 : vector<8x128xf32>
    %267 = math.tanh %266 : vector<8x128xf32>
    %268 = arith.mulf %261, %267 : vector<8x128xf32>
    %c0_60 = arith.constant 0 : index
    %c0_61 = arith.constant 0 : index
    %269 = vector.load %arg6[%c0_60, %c0_61] : memref<1x128xf32, #tpu.memory_space<vmem>>, vector<1x128xf32>
    %270 = vector.broadcast %269 : vector<1x128xf32> to vector<8x128xf32>
    %271 = arith.mulf %268, %270 : vector<8x128xf32>
    %cst_62 = arith.constant dense<0.000000e+00> : vector<8xf32>
    %272 = vector.multi_reduction <add>, %271, %cst_62 [1] : vector<8x128xf32> to vector<8xf32>
    %273 = vector.shape_cast %272 : vector<8xf32> to vector<8x1xf32>
    %c0_63 = arith.constant 0 : index
    %c0_64 = arith.constant 0 : index
    %274 = vector.load %arg7[%c0_63, %c0_64] : memref<1x1xf32, #tpu.memory_space<vmem>>, vector<1x1xf32>
    %275 = vector.broadcast %274 : vector<1x1xf32> to vector<8x1xf32>
    %276 = arith.addf %273, %275 : vector<8x1xf32>
    %c0_65 = arith.constant 0 : index
    %c0_66 = arith.constant 0 : index
    %277 = vector.load %arg8[%c0_65, %c0_66] : memref<8x1xf32, #tpu.memory_space<vmem>>, vector<8x1xf32>
    tpu.vector_store %arg8[%c0_65, %c0_66], %276 {strides = array<i32>} : memref<8x1xf32, #tpu.memory_space<vmem>>, vector<8x1xf32>,
    return
  }
}

</mosaic_0001>

<llo_original>
// kernel: tpu_custom_call.1
$region0: #{tpu_custom_call.1}
  #allocation0 [shape = 'u32[]', space=smem, size = 0x4, offset = 0x4, fixed_abs, tag = 'smem constant byte address 0x4 - core index']
  #allocation1 [shape = 'u32[144,128]{1,0:T(1,128)}', space=vmem, size = 0x12000, scoped, tag = 'internal scratch']
  #allocation2 [shape = 'f32[96,512]{1,0:T(8,128)}', space=vmem, size = 0x30000, scoped, tag = 'scratch operand']
  #allocation3 [shape = 'f32[1,1]{1,0:T(1,128)S(1)}', space=vmem, size = 0x200, scoped, tag = 'scoped memory for tpu_custom_call.1']
  %s0 = inlined_call_operand.vmem [shape: bf16[96,64], index: 0, kind: input, shape index: {}]
  %s1 = inlined_call_operand.vmem [shape: bf16[64,64], index: 1, kind: input, shape index: {}]
  %s2 = inlined_call_operand.vmem [shape: f32[1,64], index: 2, kind: input, shape index: {}]
  %s3 = inlined_call_operand.hbm [shape: bf16[64,512], index: 3, kind: input, shape index: {}]
  %s4 = inlined_call_operand.hbm [shape: bf16[128,512], index: 4, kind: input, shape index: {}]
  %s5 = inlined_call_operand.vmem [shape: f32[1,512], index: 5, kind: input, shape index: {}]
  %s6 = inlined_call_operand.vmem [shape: f32[1,128], index: 6, kind: input, shape index: {}]
  %s7 = inlined_call_operand.<no memory space> [shape: f32[1,1], index: 7, kind: input, shape index: {}]
  %s8 = inlined_call_operand.vmem [shape: f32[8,1], index: 8, kind: output, shape index: {}]
  %s9 = sld [smem:[#allocation0]]
  $region50: #{tpu_custom_call.1} parent=0
    _
  %s11 = ssub.s32 1, %s9
  %s12 = scalar_select 0, %s11, %s9
  %v13 = vstv %s7
  %14 = vst [vmem:[#allocation3] sm:$0x1] %v13
  $region1: #{tpu_custom_call.1} parent=0
    #allocation4 [shape = 'u8[65536]{0}', space=vmem, size = 0x10000, scoped, tag = 'input window, operand 3, single buffered']
    #allocation5 [shape = 's32[1]{0}', space=sflag, size = 0x4, scoped, tag = 'scoped memory for tpu_custom_call.1']
    #allocation6 [shape = 'u8[131072]{0}', space=vmem, size = 0x20000, scoped, tag = 'input window, operand 4, single buffered']
    #allocation7 [shape = 's32[1]{0}', space=sflag, size = 0x4, scoped, tag = 'scoped memory for tpu_custom_call.1']
    %15 = vsyncpa [#allocation5], 0
    %16 = vsyncpa [#allocation7], 0
    // Predicated region
    $region2: #{tpu_custom_call.1} parent=1 // pred_check
      _
    $region3: #{tpu_custom_call.1} parent=1 // pred_check_branch
      %18 = sbr.rel (0) target = $region5
    $region4: #{tpu_custom_call.1} parent=1 // pred_region
      _
    $region5: #{tpu_custom_call.1} parent=1 // pred_fallthru
      _
    // Predicated region
    $region6: #{tpu_custom_call.1} parent=1 // pred_check
      _
    $region7: #{tpu_custom_call.1} parent=1 // pred_check_branch
      %20 = sbr.rel (0) target = $region9
    $region8: #{tpu_custom_call.1} parent=1 // pred_region
      _
    $region9: #{tpu_custom_call.1} parent=1 // pred_fallthru
      _
    // Predicated region
    $region10: #{tpu_custom_call.1} parent=1 // pred_check
      _
    $region11: #{tpu_custom_call.1} parent=1 // pred_check_branch
      %22 = sbr.rel (0) target = $region13
    $region12: #{tpu_custom_call.1} parent=1 // pred_region
      _
    $region13: #{tpu_custom_call.1} parent=1 // pred_fallthru
      _
    // Predicated region
    $region14: #{tpu_custom_call.1} parent=1 // pred_check
      _
    $region15: #{tpu_custom_call.1} parent=1 // pred_check_branch
      %24 = sbr.rel (0) target = $region17
    $region16: #{tpu_custom_call.1} parent=1 // pred_region
      %s26 = ssub.s32 2048, 2048
      %27 = vsyncadd [#allocation5], %s26
      %s28 = sshll.u32 [#allocation4], 4
      %s29 = int_to_ptr.vmem [resolvable:$true] %s28
      %34 = dma.hbm_to_vmem [thread:$0]  %s3, 2048, %s29, [#allocation5], 256, 256, 16
    $region17: #{tpu_custom_call.1} parent=1 // pred_fallthru
      _
    // Predicated region
    $region18: #{tpu_custom_call.1} parent=1 // pred_check
      _
    $region19: #{tpu_custom_call.1} parent=1 // pred_check_branch
      %36 = sbr.rel (0) target = $region21
    $region20: #{tpu_custom_call.1} parent=1 // pred_region
      %s38 = ssub.s32 4096, 4096
      %39 = vsyncadd [#allocation7], %s38
      %s40 = sshll.u32 [#allocation6], 4
      %s41 = int_to_ptr.vmem [resolvable:$true] %s40
      %46 = dma.hbm_to_vmem [thread:$0]  %s4, 4096, %s41, [#allocation7], 256, 256, 16
    $region21: #{tpu_custom_call.1} parent=1 // pred_fallthru
      _
    // Predicated region
    $region22: #{tpu_custom_call.1} parent=1 // pred_check
      _
    $region23: #{tpu_custom_call.1} parent=1 // pred_check_branch
      %48 = sbr.rel (0) target = $region25
    $region24: #{tpu_custom_call.1} parent=1 // pred_region
      _
    $region25: #{tpu_custom_call.1} parent=1 // pred_fallthru
      _
    // Predicated region
    $region26: #{tpu_custom_call.1} parent=1 // pred_check
      _
    $region27: #{tpu_custom_call.1} parent=1 // pred_check_branch
      %50 = sbr.rel (0) target = $region29
    $region28: #{tpu_custom_call.1} parent=1 // pred_region
      _
    $region29: #{tpu_custom_call.1} parent=1 // pred_fallthru
      _
    // Predicated region
    $region30: #{tpu_custom_call.1} parent=1 // pred_check
      _
    $region31: #{tpu_custom_call.1} parent=1 // pred_check_branch
      %52 = sbr.rel (0) target = $region33
    $region32: #{tpu_custom_call.1} parent=1 // pred_region
      _
    $region33: #{tpu_custom_call.1} parent=1 // pred_fallthru
      _
    // Predicated region
    $region34: #{tpu_custom_call.1} parent=1 // pred_check
      _
    $region35: #{tpu_custom_call.1} parent=1 // pred_check_branch
      %54 = sbr.rel (0) target = $region37
    $region36: #{tpu_custom_call.1} parent=1 // pred_region
      %55 = dma.done [#allocation5], 2048
    $region37: #{tpu_custom_call.1} parent=1 // pred_fallthru
      _
    // Predicated region
    $region38: #{tpu_custom_call.1} parent=1 // pred_check
      _
    $region39: #{tpu_custom_call.1} parent=1 // pred_check_branch
      %57 = sbr.rel (0) target = $region41
    $region40: #{tpu_custom_call.1} parent=1 // pred_region
      %58 = dma.done [#allocation7], 4096
    $region41: #{tpu_custom_call.1} parent=1 // pred_fallthru
      _
    %v60 = vld [vmem:[%s0] sm:$0xf]
    %v61 = vld [vmem:[%s0 + $0x4] sm:$0xf]
    %v62 = vld [vmem:[%s0 + $0x8] sm:$0xf]
    %v63 = vld [vmem:[%s0 + $0xc] sm:$0xf]
    %v64 = vld [vmem:[%s0 + $0x10] sm:$0xf]
    %v65 = vld [vmem:[%s0 + $0x14] sm:$0xf]
    %v66 = vld [vmem:[%s0 + $0x18] sm:$0xf]
    %v67 = vld [vmem:[%s0 + $0x1c] sm:$0xf]
    %v68 = vld [vmem:[%s0 + $0x20] sm:$0xf]
    %v69 = vld [vmem:[%s0 + $0x24] sm:$0xf]
    %v70 = vld [vmem:[%s0 + $0x28] sm:$0xf]
    %v71 = vld [vmem:[%s0 + $0x2c] sm:$0xf]
    %v72 = vld [vmem:[%s1] sm:$0xf]
    %v73 = vld [vmem:[%s1 + $0x4] sm:$0xf]
    %v74 = vld [vmem:[%s1 + $0x8] sm:$0xf]
    %v75 = vld [vmem:[%s1 + $0xc] sm:$0xf]
    %v76 = vld [vmem:[%s1 + $0x10] sm:$0xf]
    %v77 = vld [vmem:[%s1 + $0x14] sm:$0xf]
    %v78 = vld [vmem:[%s1 + $0x18] sm:$0xf]
    %v79 = vld [vmem:[%s1 + $0x1c] sm:$0xf]
    %v80 = vld [vmem:[%s2] sm:$0x1]
    %v82 = vlaneseq
    %v83 = vshrl.u32 %v82, 7
    %v84 = vsub.s32 0, %v83
    %v85 = vrot.slane %v80, %v84
    %v99 = vunpack.c.l.b16 %v60
    %v100 = vunpack.c.l.b16 %v61
    %v101 = vunpack.c.l.b16 %v62
    %v102 = vunpack.c.l.b16 %v63
    %v103 = vunpack.c.l.b16 %v64
    %v104 = vunpack.c.l.b16 %v65
    %v105 = vunpack.c.l.b16 %v66
    %v106 = vunpack.c.l.b16 %v67
    %v107 = vunpack.c.l.b16 %v68
    %v108 = vunpack.c.l.b16 %v69
    %v109 = vunpack.c.l.b16 %v70
    %v110 = vunpack.c.l.b16 %v71
    %v111 = vpack.c.b16 %v100, %v99
    %v112 = vpack.c.b16 %v102, %v101
    %v113 = vpack.c.b16 %v104, %v103
    %v114 = vpack.c.b16 %v106, %v105
    %v115 = vpack.c.b16 %v108, %v107
    %v116 = vpack.c.b16 %v110, %v109
    %v125 = vunpack.c.l.b16 %v72
    %v126 = vunpack.c.l.b16 %v73
    %v127 = vunpack.c.l.b16 %v74
    %v128 = vunpack.c.l.b16 %v75
    %v129 = vunpack.c.l.b16 %v76
    %v130 = vunpack.c.l.b16 %v77
    %v131 = vunpack.c.l.b16 %v78
    %v132 = vunpack.c.l.b16 %v79
    %v133 = vpack.c.b16 %v126, %v125
    %v134 = vpack.c.b16 %v128, %v127
    %v135 = vpack.c.b16 %v130, %v129
    %v136 = vpack.c.b16 %v132, %v131
    %vm141 = vcmask 523264
    %v143 = vsel %vm141, %v111, 0
    %v146 = vsel %vm141, %v112, 0
    %v149 = vsel %vm141, %v113, 0
    %v152 = vsel %vm141, %v114, 0
    %v155 = vsel %vm141, %v115, 0
    %v158 = vsel %vm141, %v116, 0
    %160 = vmatprep.subr.bf16.mxu0 0
    %161 = vmatpush1.bf16.msra.mxu0 %v133
    %162 = vmatprep.subr.bf16.mxu0 0
    %163 = vmatpush1.bf16.msra.mxu0 %v134
    %164 = vmatprep.subr.bf16.mxu0 0
    %165 = vmatpush1.bf16.msra.mxu0 %v135
    %166 = vmatprep.subr.bf16.mxu0 0
    %167 = vmatpush1.bf16.msra.mxu0 %v136
    %168 = vmatprep.subr.bf16.mxu0 0
    %169 = vmatpush1.bf16.msra.mxu0 0
    %170 = vmatprep.subr.bf16.mxu0 0
    %171 = vmatpush1.bf16.msra.mxu0 0
    %172 = vmatprep.subr.bf16.mxu0 0
    %173 = vmatpush1.bf16.msra.mxu0 0
    %174 = vmatprep.subr.bf16.mxu0 0
    %175 = vmatpush1.bf16.msra.mxu0 0
    %176 = vmatprep.subr.bf16.mxu0 0
    %177 = vmatpush1.bf16.msra.mxu0 0
    %178 = vmatprep.subr.bf16.mxu0 0
    %179 = vmatpush1.bf16.msra.mxu0 0
    %180 = vmatprep.subr.bf16.mxu0 0
    %181 = vmatpush1.bf16.msra.mxu0 0
    %182 = vmatprep.subr.bf16.mxu0 0
    %183 = vmatpush1.bf16.msra.mxu0 0
    %184 = vmatprep.subr.bf16.mxu0 0
    %185 = vmatpush1.bf16.msra.mxu0 0
    %186 = vmatprep.subr.bf16.mxu0 0
    %187 = vmatpush1.bf16.msra.mxu0 0
    %188 = vmatprep.subr.bf16.mxu0 0
    %189 = vmatpush1.bf16.msra.mxu0 0
    %190 = vmatprep.subr.bf16.mxu0 0
    %191 = vmatpush1.bf16.msra.mxu0 0
    %192 = vmatprep.mubr.bf16.mxu0 0
    %193 = vmatmul.mubr.bf16.gmra.mrb[0].mxu0 %v143
    %v194 = vpop.f32.mrb[0].mxu0
    %v195 = vadd.f32 %v85, %v194
    %v196 = vpop.f32.mrb[0].mxu0
    %v197 = vpop.f32.mrb[0].mxu0
    %v198 = vadd.f32 %v85, %v197
    %v199 = vpop.f32.mrb[0].mxu0
    %200 = vmatprep.mubr.bf16.mxu0 0
    %201 = vmatmul.mubr.bf16.gmra.mrb[0].mxu0 %v146
    %v202 = vpop.f32.mrb[0].mxu0
    %v203 = vadd.f32 %v85, %v202
    %v204 = vpop.f32.mrb[0].mxu0
    %v205 = vpop.f32.mrb[0].mxu0
    %v206 = vadd.f32 %v85, %v205
    %v207 = vpop.f32.mrb[0].mxu0
    %208 = vmatprep.mubr.bf16.mxu0 0
    %209 = vmatmul.mubr.bf16.gmra.mrb[0].mxu0 %v149
    %v210 = vpop.f32.mrb[0].mxu0
    %v211 = vadd.f32 %v85, %v210
    %v212 = vpop.f32.mrb[0].mxu0
    %v213 = vpop.f32.mrb[0].mxu0
    %v214 = vadd.f32 %v85, %v213
    %v215 = vpop.f32.mrb[0].mxu0
    %216 = vmatprep.mubr.bf16.mxu0 0
    %217 = vmatmul.mubr.bf16.gmra.mrb[0].mxu0 %v152
    %v218 = vpop.f32.mrb[0].mxu0
    %v219 = vadd.f32 %v85, %v218
    %v220 = vpop.f32.mrb[0].mxu0
    %v221 = vpop.f32.mrb[0].mxu0
    %v222 = vadd.f32 %v85, %v221
    %v223 = vpop.f32.mrb[0].mxu0
    %224 = vmatprep.mubr.bf16.mxu0 0
    %225 = vmatmul.mubr.bf16.gmra.mrb[0].mxu0 %v155
    %v226 = vpop.f32.mrb[0].mxu0
    %v227 = vadd.f32 %v85, %v226
    %v228 = vpop.f32.mrb[0].mxu0
    %v229 = vpop.f32.mrb[0].mxu0
    %v230 = vadd.f32 %v85, %v229
    %v231 = vpop.f32.mrb[0].mxu0
    %232 = vmatprep.mubr.bf16.mxu0 0
    %233 = vmatmul.mubr.bf16.gmra.mrb[0].mxu0 %v158
    %v234 = vpop.f32.mrb[0].mxu0
    %v235 = vadd.f32 %v85, %v234
    %v236 = vpop.f32.mrb[0].mxu0
    %v237 = vpop.f32.mrb[0].mxu0
    %v238 = vadd.f32 %v85, %v237
    %v239 = vpop.f32.mrb[0].mxu0
    %240 = vdwg.mxu0
    %v241 = vmax.f32 %v195, 0.0
    %v242 = vmax.f32 %v198, 0.0
    %v243 = vmax.f32 %v203, 0.0
    %v244 = vmax.f32 %v206, 0.0
    %v245 = vmax.f32 %v211, 0.0
    %v246 = vmax.f32 %v214, 0.0
    %v247 = vmax.f32 %v219, 0.0
    %v248 = vmax.f32 %v222, 0.0
    %v249 = vmax.f32 %v227, 0.0
    %v250 = vmax.f32 %v230, 0.0
    %v251 = vmax.f32 %v235, 0.0
    %v252 = vmax.f32 %v238, 0.0
    %v253 = vpack.c.bf16 %v242, %v241
    %v254 = vpack.c.bf16 %v244, %v243
    %v255 = vpack.c.bf16 %v246, %v245
    %v256 = vpack.c.bf16 %v248, %v247
    %v257 = vpack.c.bf16 %v250, %v249
    %v258 = vpack.c.bf16 %v252, %v251
    %v259 = vld [vmem:[#allocation4] sm:$0xff]
    %v260 = vld [vmem:[#allocation4 + $0x8] sm:$0xff]
    %v261 = vld [vmem:[#allocation4 + $0x10] sm:$0xff]
    %v262 = vld [vmem:[#allocation4 + $0x18] sm:$0xff]
    %v263 = vld [vmem:[#allocation4 + $0x20] sm:$0xff]
    %v264 = vld [vmem:[#allocation4 + $0x28] sm:$0xff]
    %v265 = vld [vmem:[#allocation4 + $0x30] sm:$0xff]
    %v266 = vld [vmem:[#allocation4 + $0x38] sm:$0xff]
    %v267 = vld [vmem:[#allocation4 + $0x40] sm:$0xff]
    %v268 = vld [vmem:[#allocation4 + $0x48] sm:$0xff]
    %v269 = vld [vmem:[#allocation4 + $0x50] sm:$0xff]
    %v270 = vld [vmem:[#allocation4 + $0x58] sm:$0xff]
    %v271 = vld [vmem:[#allocation4 + $0x60] sm:$0xff]
    %v272 = vld [vmem:[#allocation4 + $0x68] sm:$0xff]
    %v273 = vld [vmem:[#allocation4 + $0x70] sm:$0xff]
    %v274 = vld [vmem:[#allocation4 + $0x78] sm:$0xff]
    %v275 = vld [vmem:[#allocation6] sm:$0xff]
    %v276 = vld [vmem:[#allocation6 + $0x8] sm:$0xff]
    %v277 = vld [vmem:[#allocation6 + $0x10] sm:$0xff]
    %v278 = vld [vmem:[#allocation6 + $0x18] sm:$0xff]
    %v279 = vld [vmem:[#allocation6 + $0x20] sm:$0xff]
    %v280 = vld [vmem:[#allocation6 + $0x28] sm:$0xff]
    %v281 = vld [vmem:[#allocation6 + $0x30] sm:$0xff]
    %v282 = vld [vmem:[#allocation6 + $0x38] sm:$0xff]
    %v283 = vld [vmem:[#allocation6 + $0x40] sm:$0xff]
    %v284 = vld [vmem:[#allocation6 + $0x48] sm:$0xff]
    %v285 = vld [vmem:[#allocation6 + $0x50] sm:$0xff]
    %v286 = vld [vmem:[#allocation6 + $0x58] sm:$0xff]
    %v287 = vld [vmem:[#allocation6 + $0x60] sm:$0xff]
    %v288 = vld [vmem:[#allocation6 + $0x68] sm:$0xff]
    %v289 = vld [vmem:[#allocation6 + $0x70] sm:$0xff]
    %v290 = vld [vmem:[#allocation6 + $0x78] sm:$0xff]
    %v291 = vld [vmem:[#allocation6 + $0x80] sm:$0xff]
    %v292 = vld [vmem:[#allocation6 + $0x88] sm:$0xff]
    %v293 = vld [vmem:[#allocation6 + $0x90] sm:$0xff]
    %v294 = vld [vmem:[#allocation6 + $0x98] sm:$0xff]
    %v295 = vld [vmem:[#allocation6 + $0xa0] sm:$0xff]
    %v296 = vld [vmem:[#allocation6 + $0xa8] sm:$0xff]
    %v297 = vld [vmem:[#allocation6 + $0xb0] sm:$0xff]
    %v298 = vld [vmem:[#allocation6 + $0xb8] sm:$0xff]
    %v299 = vld [vmem:[#allocation6 + $0xc0] sm:$0xff]
    %v300 = vld [vmem:[#allocation6 + $0xc8] sm:$0xff]
    %v301 = vld [vmem:[#allocation6 + $0xd0] sm:$0xff]
    %v302 = vld [vmem:[#allocation6 + $0xd8] sm:$0xff]
    %v303 = vld [vmem:[#allocation6 + $0xe0] sm:$0xff]
    %v304 = vld [vmem:[#allocation6 + $0xe8] sm:$0xff]
    %v305 = vld [vmem:[#allocation6 + $0xf0] sm:$0xff]
    %v306 = vld [vmem:[#allocation6 + $0xf8] sm:$0xff]
    %v307 = vld [vmem:[%s5] sm:$0xf]
    %v309 = vlaneseq
    %v310 = vshrl.u32 %v309, 7
    %v311 = vsub.s32 0, %v310
    %v312 = vrot.slane %v307, %v311
    %v313 = vlaneseq
    %v314 = vshrl.u32 %v313, 7
    %v315 = vsub.s32 1, %v314
    %v316 = vrot.slane %v307, %v315
    %v317 = vlaneseq
    %v318 = vshrl.u32 %v317, 7
    %v319 = vsub.s32 2, %v318
    %v320 = vrot.slane %v307, %v319
    %v321 = vlaneseq
    %v322 = vshrl.u32 %v321, 7
    %v323 = vsub.s32 3, %v322
    %v324 = vrot.slane %v307, %v323
    %v345 = vunpack.c.l.b16 %v259
    %v346 = vunpack.c.h.b16 %v259
    %v347 = vunpack.c.l.b16 %v260
    %v348 = vunpack.c.h.b16 %v260
    %v349 = vunpack.c.l.b16 %v261
    %v350 = vunpack.c.h.b16 %v261
    %v351 = vunpack.c.l.b16 %v262
    %v352 = vunpack.c.h.b16 %v262
    %v353 = vunpack.c.l.b16 %v263
    %v354 = vunpack.c.h.b16 %v263
    %v355 = vunpack.c.l.b16 %v264
    %v356 = vunpack.c.h.b16 %v264
    %v357 = vunpack.c.l.b16 %v265
    %v358 = vunpack.c.h.b16 %v265
    %v359 = vunpack.c.l.b16 %v266
    %v360 = vunpack.c.h.b16 %v266
    %v361 = vunpack.c.l.b16 %v267
    %v362 = vunpack.c.h.b16 %v267
    %v363 = vunpack.c.l.b16 %v268
    %v364 = vunpack.c.h.b16 %v268
    %v365 = vunpack.c.l.b16 %v269
    %v366 = vunpack.c.h.b16 %v269
    %v367 = vunpack.c.l.b16 %v270
    %v368 = vunpack.c.h.b16 %v270
    %v369 = vunpack.c.l.b16 %v271
    %v370 = vunpack.c.h.b16 %v271
    %v371 = vunpack.c.l.b16 %v272
    %v372 = vunpack.c.h.b16 %v272
    %v373 = vunpack.c.l.b16 %v273
    %v374 = vunpack.c.h.b16 %v273
    %v375 = vunpack.c.l.b16 %v274
    %v376 = vunpack.c.h.b16 %v274
    %v377 = vpack.c.b16 %v349, %v345
    %v378 = vpack.c.b16 %v350, %v346
    %v379 = vpack.c.b16 %v351, %v347
    %v380 = vpack.c.b16 %v352, %v348
    %v381 = vpack.c.b16 %v357, %v353
    %v382 = vpack.c.b16 %v358, %v354
    %v383 = vpack.c.b16 %v359, %v355
    %v384 = vpack.c.b16 %v360, %v356
    %v385 = vpack.c.b16 %v365, %v361
    %v386 = vpack.c.b16 %v366, %v362
    %v387 = vpack.c.b16 %v367, %v363
    %v388 = vpack.c.b16 %v368, %v364
    %v389 = vpack.c.b16 %v373, %v369
    %v390 = vpack.c.b16 %v374, %v370
    %v391 = vpack.c.b16 %v375, %v371
    %v392 = vpack.c.b16 %v376, %v372
    %v410 = vsel %vm141, %v253, 0
    %v413 = vsel %vm141, %v254, 0
    %415 = vmatprep.subr.bf16.mxu0 %v378
    %416 = vmatpush1.bf16.msra.mxu0 %v377
    %417 = vmatprep.subr.bf16.mxu0 %v382
    %418 = vmatpush1.bf16.msra.mxu0 %v381
    %419 = vmatprep.subr.bf16.mxu0 %v386
    %420 = vmatpush1.bf16.msra.mxu0 %v385
    %421 = vmatprep.subr.bf16.mxu0 %v390
    %422 = vmatpush1.bf16.msra.mxu0 %v389
    %423 = vmatprep.subr.bf16.mxu0 0
    %424 = vmatpush1.bf16.msra.mxu0 0
    %425 = vmatprep.subr.bf16.mxu0 0
    %426 = vmatpush1.bf16.msra.mxu0 0
    %427 = vmatprep.subr.bf16.mxu0 0
    %428 = vmatpush1.bf16.msra.mxu0 0
    %429 = vmatprep.subr.bf16.mxu0 0
    %430 = vmatpush1.bf16.msra.mxu0 0
    %431 = vmatprep.subr.bf16.mxu0 0
    %432 = vmatpush1.bf16.msra.mxu0 0
    %433 = vmatprep.subr.bf16.mxu0 0
    %434 = vmatpush1.bf16.msra.mxu0 0
    %435 = vmatprep.subr.bf16.mxu0 0
    %436 = vmatpush1.bf16.msra.mxu0 0
    %437 = vmatprep.subr.bf16.mxu0 0
    %438 = vmatpush1.bf16.msra.mxu0 0
    %439 = vmatprep.subr.bf16.mxu0 0
    %440 = vmatpush1.bf16.msra.mxu0 0
    %441 = vmatprep.subr.bf16.mxu0 0
    %442 = vmatpush1.bf16.msra.mxu0 0
    %443 = vmatprep.subr.bf16.mxu0 0
    %444 = vmatpush1.bf16.msra.mxu0 0
    %445 = vmatprep.subr.bf16.mxu0 0
    %446 = vmatpush1.bf16.msra.mxu0 0
    %447 = vmatprep.mubr.bf16.mxu0 0
    %448 = vmatmul.mubr.bf16.gmra.mrb[0].mxu0 %v410
    %v449 = vpop.f32.mrb[0].mxu0
    %v450 = vadd.f32 %v312, %v449
    %v451 = vpop.f32.mrb[0].mxu0
    %v452 = vadd.f32 %v316, %v451
    %v453 = vpop.f32.mrb[0].mxu0
    %v454 = vadd.f32 %v312, %v453
    %v455 = vpop.f32.mrb[0].mxu0
    %v456 = vadd.f32 %v316, %v455
    %457 = vmatprep.mubr.bf16.mxu0 0
    %458 = vmatmul.mubr.bf16.gmra.mrb[0].mxu0 %v413
    %v459 = vpop.f32.mrb[0].mxu0
    %v460 = vadd.f32 %v312, %v459
    %v461 = vpop.f32.mrb[0].mxu0
    %v462 = vadd.f32 %v316, %v461
    %v463 = vpop.f32.mrb[0].mxu0
    %v464 = vadd.f32 %v312, %v463
    %v465 = vpop.f32.mrb[0].mxu0
    %v466 = vadd.f32 %v316, %v465
    %467 = vdwg.mxu0
    %468 = vmatprep.subr.bf16.mxu0 %v380
    %469 = vmatpush1.bf16.msra.mxu0 %v379
    %470 = vmatprep.subr.bf16.mxu0 %v384
    %471 = vmatpush1.bf16.msra.mxu0 %v383
    %472 = vmatprep.subr.bf16.mxu0 %v388
    %473 = vmatpush1.bf16.msra.mxu0 %v387
    %474 = vmatprep.subr.bf16.mxu0 %v392
    %475 = vmatpush1.bf16.msra.mxu0 %v391
    %476 = vmatprep.subr.bf16.mxu0 0
    %477 = vmatpush1.bf16.msra.mxu0 0
    %478 = vmatprep.subr.bf16.mxu0 0
    %479 = vmatpush1.bf16.msra.mxu0 0
    %480 = vmatprep.subr.bf16.mxu0 0
    %481 = vmatpush1.bf16.msra.mxu0 0
    %482 = vmatprep.subr.bf16.mxu0 0
    %483 = vmatpush1.bf16.msra.mxu0 0
    %484 = vmatprep.subr.bf16.mxu0 0
    %485 = vmatpush1.bf16.msra.mxu0 0
    %486 = vmatprep.subr.bf16.mxu0 0
    %487 = vmatpush1.bf16.msra.mxu0 0
    %488 = vmatprep.subr.bf16.mxu0 0
    %489 = vmatpush1.bf16.msra.mxu0 0
    %490 = vmatprep.subr.bf16.mxu0 0
    %491 = vmatpush1.bf16.msra.mxu0 0
    %492 = vmatprep.subr.bf16.mxu0 0
    %493 = vmatpush1.bf16.msra.mxu0 0
    %494 = vmatprep.subr.bf16.mxu0 0
    %495 = vmatpush1.bf16.msra.mxu0 0
    %496 = vmatprep.subr.bf16.mxu0 0
    %497 = vmatpush1.bf16.msra.mxu0 0
    %498 = vmatprep.subr.bf16.mxu0 0
    %499 = vmatpush1.bf16.msra.mxu0 0
    %500 = vmatprep.mubr.bf16.mxu0 0
    %501 = vmatmul.mubr.bf16.gmra.mrb[0].mxu0 %v410
    %v502 = vpop.f32.mrb[0].mxu0
    %v503 = vadd.f32 %v320, %v502
    %v504 = vpop.f32.mrb[0].mxu0
    %v505 = vadd.f32 %v324, %v504
    %v506 = vpop.f32.mrb[0].mxu0
    %v507 = vadd.f32 %v320, %v506
    %v508 = vpop.f32.mrb[0].mxu0
    %v509 = vadd.f32 %v324, %v508
    %510 = vmatprep.mubr.bf16.mxu0 0
    %511 = vmatmul.mubr.bf16.gmra.mrb[0].mxu0 %v413
    %v512 = vpop.f32.mrb[0].mxu0
    %v513 = vadd.f32 %v320, %v512
    %v514 = vpop.f32.mrb[0].mxu0
    %v515 = vadd.f32 %v324, %v514
    %v516 = vpop.f32.mrb[0].mxu0
    %v517 = vadd.f32 %v320, %v516
    %v518 = vpop.f32.mrb[0].mxu0
    %v519 = vadd.f32 %v324, %v518
    %520 = vdwg.mxu0
    %521 = vst [vmem:[#allocation2] sm:$0xff] %v450
    %522 = vst [vmem:[#allocation2 + $0x8] sm:$0xff] %v452
    %523 = vst [vmem:[#allocation2 + $0x10] sm:$0xff] %v503
    %524 = vst [vmem:[#allocation2 + $0x18] sm:$0xff] %v505
    %525 = vst [vmem:[#allocation2 + $0x20] sm:$0xff] %v454
    %526 = vst [vmem:[#allocation2 + $0x28] sm:$0xff] %v456
    %527 = vst [vmem:[#allocation2 + $0x30] sm:$0xff] %v507
    %528 = vst [vmem:[#allocation2 + $0x38] sm:$0xff] %v509
    %529 = vst [vmem:[#allocation2 + $0x40] sm:$0xff] %v460
    %530 = vst [vmem:[#allocation2 + $0x48] sm:$0xff] %v462
    %531 = vst [vmem:[#allocation2 + $0x50] sm:$0xff] %v513
    %532 = vst [vmem:[#allocation2 + $0x58] sm:$0xff] %v515
    %533 = vst [vmem:[#allocation2 + $0x60] sm:$0xff] %v464
    %534 = vst [vmem:[#allocation2 + $0x68] sm:$0xff] %v466
    %535 = vst [vmem:[#allocation2 + $0x70] sm:$0xff] %v517
    %536 = vst [vmem:[#allocation2 + $0x78] sm:$0xff] %v519
    %v538 = vsel %vm141, %v255, 0
    %v541 = vsel %vm141, %v256, 0
    %543 = vmatprep.subr.bf16.mxu0 %v378
    %544 = vmatpush1.bf16.msra.mxu0 %v377
    %545 = vmatprep.subr.bf16.mxu0 %v382
    %546 = vmatpush1.bf16.msra.mxu0 %v381
    %547 = vmatprep.subr.bf16.mxu0 %v386
    %548 = vmatpush1.bf16.msra.mxu0 %v385
    %549 = vmatprep.subr.bf16.mxu0 %v390
    %550 = vmatpush1.bf16.msra.mxu0 %v389
    %551 = vmatprep.subr.bf16.mxu0 0
    %552 = vmatpush1.bf16.msra.mxu0 0
    %553 = vmatprep.subr.bf16.mxu0 0
    %554 = vmatpush1.bf16.msra.mxu0 0
    %555 = vmatprep.subr.bf16.mxu0 0
    %556 = vmatpush1.bf16.msra.mxu0 0
    %557 = vmatprep.subr.bf16.mxu0 0
    %558 = vmatpush1.bf16.msra.mxu0 0
    %559 = vmatprep.subr.bf16.mxu0 0
    %560 = vmatpush1.bf16.msra.mxu0 0
    %561 = vmatprep.subr.bf16.mxu0 0
    %562 = vmatpush1.bf16.msra.mxu0 0
    %563 = vmatprep.subr.bf16.mxu0 0
    %564 = vmatpush1.bf16.msra.mxu0 0
    %565 = vmatprep.subr.bf16.mxu0 0
    %566 = vmatpush1.bf16.msra.mxu0 0
    %567 = vmatprep.subr.bf16.mxu0 0
    %568 = vmatpush1.bf16.msra.mxu0 0
    %569 = vmatprep.subr.bf16.mxu0 0
    %570 = vmatpush1.bf16.msra.mxu0 0
    %571 = vmatprep.subr.bf16.mxu0 0
    %572 = vmatpush1.bf16.msra.mxu0 0
    %573 = vmatprep.subr.bf16.mxu0 0
    %574 = vmatpush1.bf16.msra.mxu0 0
    %575 = vmatprep.mubr.bf16.mxu0 0
    %576 = vmatmul.mubr.bf16.gmra.mrb[0].mxu0 %v538
    %v577 = vpop.f32.mrb[0].mxu0
    %v578 = vadd.f32 %v312, %v577
    %v579 = vpop.f32.mrb[0].mxu0
    %v580 = vadd.f32 %v316, %v579
    %v581 = vpop.f32.mrb[0].mxu0
    %v582 = vadd.f32 %v312, %v581
    %v583 = vpop.f32.mrb[0].mxu0
    %v584 = vadd.f32 %v316, %v583
    %585 = vmatprep.mubr.bf16.mxu0 0
    %586 = vmatmul.mubr.bf16.gmra.mrb[0].mxu0 %v541
    %v587 = vpop.f32.mrb[0].mxu0
    %v588 = vadd.f32 %v312, %v587
    %v589 = vpop.f32.mrb[0].mxu0
    %v590 = vadd.f32 %v316, %v589
    %v591 = vpop.f32.mrb[0].mxu0
    %v592 = vadd.f32 %v312, %v591
    %v593 = vpop.f32.mrb[0].mxu0
    %v594 = vadd.f32 %v316, %v593
    %595 = vdwg.mxu0
    %596 = vmatprep.subr.bf16.mxu0 %v380
    %597 = vmatpush1.bf16.msra.mxu0 %v379
    %598 = vmatprep.subr.bf16.mxu0 %v384
    %599 = vmatpush1.bf16.msra.mxu0 %v383
    %600 = vmatprep.subr.bf16.mxu0 %v388
    %601 = vmatpush1.bf16.msra.mxu0 %v387
    %602 = vmatprep.subr.bf16.mxu0 %v392
    %603 = vmatpush1.bf16.msra.mxu0 %v391
    %604 = vmatprep.subr.bf16.mxu0 0
    %605 = vmatpush1.bf16.msra.mxu0 0
    %606 = vmatprep.subr.bf16.mxu0 0
    %607 = vmatpush1.bf16.msra.mxu0 0
    %608 = vmatprep.subr.bf16.mxu0 0
    %609 = vmatpush1.bf16.msra.mxu0 0
    %610 = vmatprep.subr.bf16.mxu0 0
    %611 = vmatpush1.bf16.msra.mxu0 0
    %612 = vmatprep.subr.bf16.mxu0 0
    %613 = vmatpush1.bf16.msra.mxu0 0
    %614 = vmatprep.subr.bf16.mxu0 0
    %615 = vmatpush1.bf16.msra.mxu0 0
    %616 = vmatprep.subr.bf16.mxu0 0
    %617 = vmatpush1.bf16.msra.mxu0 0
    %618 = vmatprep.subr.bf16.mxu0 0
    %619 = vmatpush1.bf16.msra.mxu0 0
    %620 = vmatprep.subr.bf16.mxu0 0
    %621 = vmatpush1.bf16.msra.mxu0 0
    %622 = vmatprep.subr.bf16.mxu0 0
    %623 = vmatpush1.bf16.msra.mxu0 0
    %624 = vmatprep.subr.bf16.mxu0 0
    %625 = vmatpush1.bf16.msra.mxu0 0
    %626 = vmatprep.subr.bf16.mxu0 0
    %627 = vmatpush1.bf16.msra.mxu0 0
    %628 = vmatprep.mubr.bf16.mxu0 0
    %629 = vmatmul.mubr.bf16.gmra.mrb[0].mxu0 %v538
    %v630 = vpop.f32.mrb[0].mxu0
    %v631 = vadd.f32 %v320, %v630
    %v632 = vpop.f32.mrb[0].mxu0
    %v633 = vadd.f32 %v324, %v632
    %v634 = vpop.f32.mrb[0].mxu0
    %v635 = vadd.f32 %v320, %v634
    %v636 = vpop.f32.mrb[0].mxu0
    %v637 = vadd.f32 %v324, %v636
    %638 = vmatprep.mubr.bf16.mxu0 0
    %639 = vmatmul.mubr.bf16.gmra.mrb[0].mxu0 %v541
    %v640 = vpop.f32.mrb[0].mxu0
    %v641 = vadd.f32 %v320, %v640
    %v642 = vpop.f32.mrb[0].mxu0
    %v643 = vadd.f32 %v324, %v642
    %v644 = vpop.f32.mrb[0].mxu0
    %v645 = vadd.f32 %v320, %v644
    %v646 = vpop.f32.mrb[0].mxu0
    %v647 = vadd.f32 %v324, %v646
    %648 = vdwg.mxu0
    %649 = vst [vmem:[#allocation2 + $0x80] sm:$0xff] %v578
    %650 = vst [vmem:[#allocation2 + $0x88] sm:$0xff] %v580
    %651 = vst [vmem:[#allocation2 + $0x90] sm:$0xff] %v631
    %652 = vst [vmem:[#allocation2 + $0x98] sm:$0xff] %v633
    %653 = vst [vmem:[#allocation2 + $0xa0] sm:$0xff] %v582
    %654 = vst [vmem:[#allocation2 + $0xa8] sm:$0xff] %v584
    %655 = vst [vmem:[#allocation2 + $0xb0] sm:$0xff] %v635
    %656 = vst [vmem:[#allocation2 + $0xb8] sm:$0xff] %v637
    %657 = vst [vmem:[#allocation2 + $0xc0] sm:$0xff] %v588
    %658 = vst [vmem:[#allocation2 + $0xc8] sm:$0xff] %v590
    %659 = vst [vmem:[#allocation2 + $0xd0] sm:$0xff] %v641
    %660 = vst [vmem:[#allocation2 + $0xd8] sm:$0xff] %v643
    %661 = vst [vmem:[#allocation2 + $0xe0] sm:$0xff] %v592
    %662 = vst [vmem:[#allocation2 + $0xe8] sm:$0xff] %v594
    %663 = vst [vmem:[#allocation2 + $0xf0] sm:$0xff] %v645
    %664 = vst [vmem:[#allocation2 + $0xf8] sm:$0xff] %v647
    %v665 = vld [vmem:[#allocation2] sm:$0xff]
    %v666 = vld [vmem:[#allocation2 + $0x8] sm:$0xff]
    %v667 = vld [vmem:[#allocation2 + $0x10] sm:$0xff]
    %v668 = vld [vmem:[#allocation2 + $0x18] sm:$0xff]
    %v701 = vunpack.c.l.b16 %v275
    %v702 = vunpack.c.h.b16 %v275
    %v703 = vunpack.c.l.b16 %v276
    %v704 = vunpack.c.h.b16 %v276
    %v705 = vunpack.c.l.b16 %v277
    %v706 = vunpack.c.h.b16 %v277
    %v707 = vunpack.c.l.b16 %v278
    %v708 = vunpack.c.h.b16 %v278
    %v709 = vunpack.c.l.b16 %v279
    %v710 = vunpack.c.h.b16 %v279
    %v711 = vunpack.c.l.b16 %v280
    %v712 = vunpack.c.h.b16 %v280
    %v713 = vunpack.c.l.b16 %v281
    %v714 = vunpack.c.h.b16 %v281
    %v715 = vunpack.c.l.b16 %v282
    %v716 = vunpack.c.h.b16 %v282
    %v717 = vunpack.c.l.b16 %v283
    %v718 = vunpack.c.h.b16 %v283
    %v719 = vunpack.c.l.b16 %v284
    %v720 = vunpack.c.h.b16 %v284
    %v721 = vunpack.c.l.b16 %v285
    %v722 = vunpack.c.h.b16 %v285
    %v723 = vunpack.c.l.b16 %v286
    %v724 = vunpack.c.h.b16 %v286
    %v725 = vunpack.c.l.b16 %v287
    %v726 = vunpack.c.h.b16 %v287
    %v727 = vunpack.c.l.b16 %v288
    %v728 = vunpack.c.h.b16 %v288
    %v729 = vunpack.c.l.b16 %v289
    %v730 = vunpack.c.h.b16 %v289
    %v731 = vunpack.c.l.b16 %v290
    %v732 = vunpack.c.h.b16 %v290
    %v733 = vunpack.c.l.b16 %v291
    %v734 = vunpack.c.h.b16 %v291
    %v735 = vunpack.c.l.b16 %v292
    %v736 = vunpack.c.h.b16 %v292
    %v737 = vunpack.c.l.b16 %v293
    %v738 = vunpack.c.h.b16 %v293
    %v739 = vunpack.c.l.b16 %v294
    %v740 = vunpack.c.h.b16 %v294
    %v741 = vunpack.c.l.b16 %v295
    %v742 = vunpack.c.h.b16 %v295
    %v743 = vunpack.c.l.b16 %v296
    %v744 = vunpack.c.h.b16 %v296
    %v745 = vunpack.c.l.b16 %v297
    %v746 = vunpack.c.h.b16 %v297
    %v747 = vunpack.c.l.b16 %v298
    %v748 = vunpack.c.h.b16 %v298
    %v749 = vunpack.c.l.b16 %v299
    %v750 = vunpack.c.h.b16 %v299
    %v751 = vunpack.c.l.b16 %v300
    %v752 = vunpack.c.h.b16 %v300
    %v753 = vunpack.c.l.b16 %v301
    %v754 = vunpack.c.h.b16 %v301
    %v755 = vunpack.c.l.b16 %v302
    %v756 = vunpack.c.h.b16 %v302
    %v757 = vunpack.c.l.b16 %v303
    %v758 = vunpack.c.h.b16 %v303
    %v759 = vunpack.c.l.b16 %v304
    %v760 = vunpack.c.h.b16 %v304
    %v761 = vunpack.c.l.b16 %v305
    %v762 = vunpack.c.h.b16 %v305
    %v763 = vunpack.c.l.b16 %v306
    %v764 = vunpack.c.h.b16 %v306
    %v765 = vpack.c.b16 %v705, %v701
    %v766 = vpack.c.b16 %v706, %v702
    %v767 = vpack.c.b16 %v707, %v703
    %v768 = vpack.c.b16 %v708, %v704
    %v769 = vpack.c.b16 %v713, %v709
    %v770 = vpack.c.b16 %v714, %v710
    %v771 = vpack.c.b16 %v715, %v711
    %v772 = vpack.c.b16 %v716, %v712
    %v773 = vpack.c.b16 %v721, %v717
    %v774 = vpack.c.b16 %v722, %v718
    %v775 = vpack.c.b16 %v723, %v719
    %v776 = vpack.c.b16 %v724, %v720
    %v777 = vpack.c.b16 %v729, %v725
    %v778 = vpack.c.b16 %v730, %v726
    %v779 = vpack.c.b16 %v731, %v727
    %v780 = vpack.c.b16 %v732, %v728
    %v781 = vpack.c.b16 %v737, %v733
    %v782 = vpack.c.b16 %v738, %v734
    %v783 = vpack.c.b16 %v739, %v735
    %v784 = vpack.c.b16 %v740, %v736
    %v785 = vpack.c.b16 %v745, %v741
    %v786 = vpack.c.b16 %v746, %v742
    %v787 = vpack.c.b16 %v747, %v743
    %v788 = vpack.c.b16 %v748, %v744
    %v789 = vpack.c.b16 %v753, %v749
    %v790 = vpack.c.b16 %v754, %v750
    %v791 = vpack.c.b16 %v755, %v751
    %v792 = vpack.c.b16 %v756, %v752
    %v793 = vpack.c.b16 %v761, %v757
    %v794 = vpack.c.b16 %v762, %v758
    %v795 = vpack.c.b16 %v763, %v759
    %v796 = vpack.c.b16 %v764, %v760
    %829 = vmatprep.subr.bf16.mxu0 %v766
    %830 = vmatpush1.bf16.msra.mxu0 %v765
    %831 = vmatprep.subr.bf16.mxu0 %v770
    %832 = vmatpush1.bf16.msra.mxu0 %v769
    %833 = vmatprep.subr.bf16.mxu0 %v774
    %834 = vmatpush1.bf16.msra.mxu0 %v773
    %835 = vmatprep.subr.bf16.mxu0 %v778
    %836 = vmatpush1.bf16.msra.mxu0 %v777
    %837 = vmatprep.subr.bf16.mxu0 %v782
    %838 = vmatpush1.bf16.msra.mxu0 %v781
    %839 = vmatprep.subr.bf16.mxu0 %v786
    %840 = vmatpush1.bf16.msra.mxu0 %v785
    %841 = vmatprep.subr.bf16.mxu0 %v790
    %842 = vmatpush1.bf16.msra.mxu0 %v789
    %843 = vmatprep.subr.bf16.mxu0 %v794
    %844 = vmatpush1.bf16.msra.mxu0 %v793
    %845 = vmatprep.subr.bf16.mxu0 0
    %846 = vmatpush1.bf16.msra.mxu0 0
    %847 = vmatprep.subr.bf16.mxu0 0
    %848 = vmatpush1.bf16.msra.mxu0 0
    %849 = vmatprep.subr.bf16.mxu0 0
    %850 = vmatpush1.bf16.msra.mxu0 0
    %851 = vmatprep.subr.bf16.mxu0 0
    %852 = vmatpush1.bf16.msra.mxu0 0
    %853 = vmatprep.subr.bf16.mxu0 0
    %854 = vmatpush1.bf16.msra.mxu0 0
    %855 = vmatprep.subr.bf16.mxu0 0
    %856 = vmatpush1.bf16.msra.mxu0 0
    %857 = vmatprep.subr.bf16.mxu0 0
    %858 = vmatpush1.bf16.msra.mxu0 0
    %859 = vmatprep.subr.bf16.mxu0 0
    %860 = vmatpush1.bf16.msra.mxu0 0
    %861 = vmatprep.mubr.bf16.mxu0 0
    %862 = vmatmul.mubr.bf16.gmra.mrb[0].mxu0 0
    %v863 = vpop.f32.mrb[0].mxu0
    %v864 = vadd.f32 0.0, %v863
    %v865 = vpop.f32.mrb[0].mxu0
    %v866 = vadd.f32 0.0, %v865
    %v867 = vpop.f32.mrb[0].mxu0
    %v868 = vpop.f32.mrb[0].mxu0
    %869 = vdwg.mxu0
    %870 = vmatprep.subr.bf16.mxu0 %v768
    %871 = vmatpush1.bf16.msra.mxu0 %v767
    %872 = vmatprep.subr.bf16.mxu0 %v772
    %873 = vmatpush1.bf16.msra.mxu0 %v771
    %874 = vmatprep.subr.bf16.mxu0 %v776
    %875 = vmatpush1.bf16.msra.mxu0 %v775
    %876 = vmatprep.subr.bf16.mxu0 %v780
    %877 = vmatpush1.bf16.msra.mxu0 %v779
    %878 = vmatprep.subr.bf16.mxu0 %v784
    %879 = vmatpush1.bf16.msra.mxu0 %v783
    %880 = vmatprep.subr.bf16.mxu0 %v788
    %881 = vmatpush1.bf16.msra.mxu0 %v787
    %882 = vmatprep.subr.bf16.mxu0 %v792
    %883 = vmatpush1.bf16.msra.mxu0 %v791
    %884 = vmatprep.subr.bf16.mxu0 %v796
    %885 = vmatpush1.bf16.msra.mxu0 %v795
    %886 = vmatprep.subr.bf16.mxu0 0
    %887 = vmatpush1.bf16.msra.mxu0 0
    %888 = vmatprep.subr.bf16.mxu0 0
    %889 = vmatpush1.bf16.msra.mxu0 0
    %890 = vmatprep.subr.bf16.mxu0 0
    %891 = vmatpush1.bf16.msra.mxu0 0
    %892 = vmatprep.subr.bf16.mxu0 0
    %893 = vmatpush1.bf16.msra.mxu0 0
    %894 = vmatprep.subr.bf16.mxu0 0
    %895 = vmatpush1.bf16.msra.mxu0 0
    %896 = vmatprep.subr.bf16.mxu0 0
    %897 = vmatpush1.bf16.msra.mxu0 0
    %898 = vmatprep.subr.bf16.mxu0 0
    %899 = vmatpush1.bf16.msra.mxu0 0
    %900 = vmatprep.subr.bf16.mxu0 0
    %901 = vmatpush1.bf16.msra.mxu0 0
    %902 = vmatprep.mubr.bf16.mxu0 0
    %903 = vmatmul.mubr.bf16.gmra.mrb[0].mxu0 0
    %v904 = vpop.f32.mrb[0].mxu0
    %v905 = vadd.f32 0.0, %v904
    %v906 = vpop.f32.mrb[0].mxu0
    %v907 = vadd.f32 0.0, %v906
    %v908 = vpop.f32.mrb[0].mxu0
    %v909 = vpop.f32.mrb[0].mxu0
    %910 = vdwg.mxu0
    %v911 = vadd.f32 %v665, %v864
    %v912 = vadd.f32 %v666, %v866
    %v913 = vadd.f32 %v667, %v905
    %v914 = vadd.f32 %v668, %v907
    %v915 = vxor.u32 %v911, 2147483648
    %v916 = vxor.u32 %v912, 2147483648
    %v917 = vxor.u32 %v913, 2147483648
    %v918 = vmul.f32 %v915, 1.442695
    %v919 = vpow.pop %v918
    %v920 = vmul.f32 %v916, 1.442695
    %v921 = vpow.pop %v920
    %v922 = vmul.f32 %v917, 1.442695
    %v923 = vpow.pop %v922
    %v924 = vadd.f32 %v919, 1.0
    %v925 = vadd.f32 %v921, 1.0
    %v926 = vadd.f32 %v923, 1.0
    %v927 = vrcp.pop %v924
    %v928 = vmul.f32 1.0, %v927
    %v929 = vrcp.pop %v925
    %v930 = vmul.f32 1.0, %v929
    %v931 = vrcp.pop %v926
    %v932 = vmul.f32 1.0, %v931
    %v933 = vtanh.pop %v914
    %v934 = vmul.f32 %v930, 0.0
    %v935 = vmul.f32 %v928, %v933
    %v936 = vadd.f32 %v934, %v935
    %v937 = vtanh.pop %v936
    %v938 = vmul.f32 %v932, %v937
    %v939 = vld [vmem:[#allocation2 + $0x20] sm:$0xff]
    %v940 = vld [vmem:[#allocation2 + $0x28] sm:$0xff]
    %v941 = vld [vmem:[#allocation2 + $0x30] sm:$0xff]
    %v942 = vld [vmem:[#allocation2 + $0x38] sm:$0xff]
    %v943 = vpack.c.bf16 %v938, %v938
    %944 = vmatprep.subr.bf16.mxu0 %v766
    %945 = vmatpush1.bf16.msra.mxu0 %v765
    %946 = vmatprep.subr.bf16.mxu0 %v770
    %947 = vmatpush1.bf16.msra.mxu0 %v769
    %948 = vmatprep.subr.bf16.mxu0 %v774
    %949 = vmatpush1.bf16.msra.mxu0 %v773
    %950 = vmatprep.subr.bf16.mxu0 %v778
    %951 = vmatpush1.bf16.msra.mxu0 %v777
    %952 = vmatprep.subr.bf16.mxu0 %v782
    %953 = vmatpush1.bf16.msra.mxu0 %v781
    %954 = vmatprep.subr.bf16.mxu0 %v786
    %955 = vmatpush1.bf16.msra.mxu0 %v785
    %956 = vmatprep.subr.bf16.mxu0 %v790
    %957 = vmatpush1.bf16.msra.mxu0 %v789
    %958 = vmatprep.subr.bf16.mxu0 %v794
    %959 = vmatpush1.bf16.msra.mxu0 %v793
    %960 = vmatprep.subr.bf16.mxu0 0
    %961 = vmatpush1.bf16.msra.mxu0 0
    %962 = vmatprep.subr.bf16.mxu0 0
    %963 = vmatpush1.bf16.msra.mxu0 0
    %964 = vmatprep.subr.bf16.mxu0 0
    %965 = vmatpush1.bf16.msra.mxu0 0
    %966 = vmatprep.subr.bf16.mxu0 0
    %967 = vmatpush1.bf16.msra.mxu0 0
    %968 = vmatprep.subr.bf16.mxu0 0
    %969 = vmatpush1.bf16.msra.mxu0 0
    %970 = vmatprep.subr.bf16.mxu0 0
    %971 = vmatpush1.bf16.msra.mxu0 0
    %972 = vmatprep.subr.bf16.mxu0 0
    %973 = vmatpush1.bf16.msra.mxu0 0
    %974 = vmatprep.subr.bf16.mxu0 0
    %975 = vmatpush1.bf16.msra.mxu0 0
    %976 = vmatprep.mubr.bf16.mxu0 0
    %977 = vmatmul.mubr.bf16.gmra.mrb[0].mxu0 %v943
    %v978 = vpop.f32.mrb[0].mxu0
    %v979 = vadd.f32 0.0, %v978
    %v980 = vpop.f32.mrb[0].mxu0
    %v981 = vadd.f32 0.0, %v980
    %v982 = vpop.f32.mrb[0].mxu0
    %v983 = vpop.f32.mrb[0].mxu0
    %984 = vdwg.mxu0
    %985 = vmatprep.subr.bf16.mxu0 %v768
    %986 = vmatpush1.bf16.msra.mxu0 %v767
    %987 = vmatprep.subr.bf16.mxu0 %v772
    %988 = vmatpush1.bf16.msra.mxu0 %v771
    %989 = vmatprep.subr.bf16.mxu0 %v776
    %990 = vmatpush1.bf16.msra.mxu0 %v775
    %991 = vmatprep.subr.bf16.mxu0 %v780
    %992 = vmatpush1.bf16.msra.mxu0 %v779
    %993 = vmatprep.subr.bf16.mxu0 %v784
    %994 = vmatpush1.bf16.msra.mxu0 %v783
    %995 = vmatprep.subr.bf16.mxu0 %v788
    %996 = vmatpush1.bf16.msra.mxu0 %v787
    %997 = vmatprep.subr.bf16.mxu0 %v792
    %998 = vmatpush1.bf16.msra.mxu0 %v791
    %999 = vmatprep.subr.bf16.mxu0 %v796
    %1000 = vmatpush1.bf16.msra.mxu0 %v795
    %1001 = vmatprep.subr.bf16.mxu0 0
    %1002 = vmatpush1.bf16.msra.mxu0 0
    %1003 = vmatprep.subr.bf16.mxu0 0
    %1004 = vmatpush1.bf16.msra.mxu0 0
    %1005 = vmatprep.subr.bf16.mxu0 0
    %1006 = vmatpush1.bf16.msra.mxu0 0
    %1007 = vmatprep.subr.bf16.mxu0 0
    %1008 = vmatpush1.bf16.msra.mxu0 0
    %1009 = vmatprep.subr.bf16.mxu0 0
    %1010 = vmatpush1.bf16.msra.mxu0 0
    %1011 = vmatprep.subr.bf16.mxu0 0
    %1012 = vmatpush1.bf16.msra.mxu0 0
    %1013 = vmatprep.subr.bf16.mxu0 0
    %1014 = vmatpush1.bf16.msra.mxu0 0
    %1015 = vmatprep.subr.bf16.mxu0 0
    %1016 = vmatpush1.bf16.msra.mxu0 0
    %1017 = vmatprep.mubr.bf16.mxu0 0
    %1018 = vmatmul.mubr.bf16.gmra.mrb[0].mxu0 %v943
    %v1019 = vpop.f32.mrb[0].mxu0
    %v1020 = vadd.f32 0.0, %v1019
    %v1021 = vpop.f32.mrb[0].mxu0
    %v1022 = vadd.f32 0.0, %v1021
    %v1023 = vpop.f32.mrb[0].mxu0
    %v1024 = vpop.f32.mrb[0].mxu0
    %1025 = vdwg.mxu0
    %v1026 = vadd.f32 %v939, %v979
    %v1027 = vadd.f32 %v940, %v981
    %v1028 = vadd.f32 %v941, %v1020
    %v1029 = vadd.f32 %v942, %v1022
    %v1030 = vxor.u32 %v1026, 2147483648
    %v1031 = vxor.u32 %v1027, 2147483648
    %v1032 = vxor.u32 %v1028, 2147483648
    %v1033 = vmul.f32 %v1030, 1.442695
    %v1034 = vpow.pop %v1033
    %v1035 = vmul.f32 %v1031, 1.442695
    %v1036 = vpow.pop %v1035
    %v1037 = vmul.f32 %v1032, 1.442695
    %v1038 = vpow.pop %v1037
    %v1039 = vadd.f32 %v1034, 1.0
    %v1040 = vadd.f32 %v1036, 1.0
    %v1041 = vadd.f32 %v1038, 1.0
    %v1042 = vrcp.pop %v1039
    %v1043 = vmul.f32 1.0, %v1042
    %v1044 = vrcp.pop %v1040
    %v1045 = vmul.f32 1.0, %v1044
    %v1046 = vrcp.pop %v1041
    %v1047 = vmul.f32 1.0, %v1046
    %v1048 = vtanh.pop %v1029
    %v1049 = vmul.f32 %v1045, %v936
    %v1050 = vmul.f32 %v1043, %v1048
    %v1051 = vadd.f32 %v1049, %v1050
    %v1052 = vtanh.pop %v1051
    %v1053 = vmul.f32 %v1047, %v1052
    %v1054 = vld [vmem:[#allocation2 + $0x40] sm:$0xff]
    %v1055 = vld [vmem:[#allocation2 + $0x48] sm:$0xff]
    %v1056 = vld [vmem:[#allocation2 + $0x50] sm:$0xff]
    %v1057 = vld [vmem:[#allocation2 + $0x58] sm:$0xff]
    %v1058 = vpack.c.bf16 %v1053, %v1053
    %1059 = vmatprep.subr.bf16.mxu0 %v766
    %1060 = vmatpush1.bf16.msra.mxu0 %v765
    %1061 = vmatprep.subr.bf16.mxu0 %v770
    %1062 = vmatpush1.bf16.msra.mxu0 %v769
    %1063 = vmatprep.subr.bf16.mxu0 %v774
    %1064 = vmatpush1.bf16.msra.mxu0 %v773
    %1065 = vmatprep.subr.bf16.mxu0 %v778
    %1066 = vmatpush1.bf16.msra.mxu0 %v777
    %1067 = vmatprep.subr.bf16.mxu0 %v782
    %1068 = vmatpush1.bf16.msra.mxu0 %v781
    %1069 = vmatprep.subr.bf16.mxu0 %v786
    %1070 = vmatpush1.bf16.msra.mxu0 %v785
    %1071 = vmatprep.subr.bf16.mxu0 %v790
    %1072 = vmatpush1.bf16.msra.mxu0 %v789
    %1073 = vmatprep.subr.bf16.mxu0 %v794
    %1074 = vmatpush1.bf16.msra.mxu0 %v793
    %1075 = vmatprep.subr.bf16.mxu0 0
    %1076 = vmatpush1.bf16.msra.mxu0 0
    %1077 = vmatprep.subr.bf16.mxu0 0
    %1078 = vmatpush1.bf16.msra.mxu0 0
    %1079 = vmatprep.subr.bf16.mxu0 0
    %1080 = vmatpush1.bf16.msra.mxu0 0
    %1081 = vmatprep.subr.bf16.mxu0 0
    %1082 = vmatpush1.bf16.msra.mxu0 0
    %1083 = vmatprep.subr.bf16.mxu0 0
    %1084 = vmatpush1.bf16.msra.mxu0 0
    %1085 = vmatprep.subr.bf16.mxu0 0
    %1086 = vmatpush1.bf16.msra.mxu0 0
    %1087 = vmatprep.subr.bf16.mxu0 0
    %1088 = vmatpush1.bf16.msra.mxu0 0
    %1089 = vmatprep.subr.bf16.mxu0 0
    %1090 = vmatpush1.bf16.msra.mxu0 0
    %1091 = vmatprep.mubr.bf16.mxu0 0
    %1092 = vmatmul.mubr.bf16.gmra.mrb[0].mxu0 %v1058
    %v1093 = vpop.f32.mrb[0].mxu0
    %v1094 = vadd.f32 0.0, %v1093
    %v1095 = vpop.f32.mrb[0].mxu0
    %v1096 = vadd.f32 0.0, %v1095
    %v1097 = vpop.f32.mrb[0].mxu0
    %v1098 = vpop.f32.mrb[0].mxu0
    %1099 = vdwg.mxu0
    %1100 = vmatprep.subr.bf16.mxu0 %v768
    %1101 = vmatpush1.bf16.msra.mxu0 %v767
    %1102 = vmatprep.subr.bf16.mxu0 %v772
    %1103 = vmatpush1.bf16.msra.mxu0 %v771
    %1104 = vmatprep.subr.bf16.mxu0 %v776
    %1105 = vmatpush1.bf16.msra.mxu0 %v775
    %1106 = vmatprep.subr.bf16.mxu0 %v780
    %1107 = vmatpush1.bf16.msra.mxu0 %v779
    %1108 = vmatprep.subr.bf16.mxu0 %v784
    %1109 = vmatpush1.bf16.msra.mxu0 %v783
    %1110 = vmatprep.subr.bf16.mxu0 %v788
    %1111 = vmatpush1.bf16.msra.mxu0 %v787
    %1112 = vmatprep.subr.bf16.mxu0 %v792
    %1113 = vmatpush1.bf16.msra.mxu0 %v791
    %1114 = vmatprep.subr.bf16.mxu0 %v796
    %1115 = vmatpush1.bf16.msra.mxu0 %v795
    %1116 = vmatprep.subr.bf16.mxu0 0
    %1117 = vmatpush1.bf16.msra.mxu0 0
    %1118 = vmatprep.subr.bf16.mxu0 0
    %1119 = vmatpush1.bf16.msra.mxu0 0
    %1120 = vmatprep.subr.bf16.mxu0 0
    %1121 = vmatpush1.bf16.msra.mxu0 0
    %1122 = vmatprep.subr.bf16.mxu0 0
    %1123 = vmatpush1.bf16.msra.mxu0 0
    %1124 = vmatprep.subr.bf16.mxu0 0
    %1125 = vmatpush1.bf16.msra.mxu0 0
    %1126 = vmatprep.subr.bf16.mxu0 0
    %1127 = vmatpush1.bf16.msra.mxu0 0
    %1128 = vmatprep.subr.bf16.mxu0 0
    %1129 = vmatpush1.bf16.msra.mxu0 0
    %1130 = vmatprep.subr.bf16.mxu0 0
    %1131 = vmatpush1.bf16.msra.mxu0 0
    %1132 = vmatprep.mubr.bf16.mxu0 0
    %1133 = vmatmul.mubr.bf16.gmra.mrb[0].mxu0 %v1058
    %v1134 = vpop.f32.mrb[0].mxu0
    %v1135 = vadd.f32 0.0, %v1134
    %v1136 = vpop.f32.mrb[0].mxu0
    %v1137 = vadd.f32 0.0, %v1136
    %v1138 = vpop.f32.mrb[0].mxu0
    %v1139 = vpop.f32.mrb[0].mxu0
    %1140 = vdwg.mxu0
    %v1141 = vadd.f32 %v1054, %v1094
    %v1142 = vadd.f32 %v1055, %v1096
    %v1143 = vadd.f32 %v1056, %v1135
    %v1144 = vadd.f32 %v1057, %v1137
    %v1145 = vxor.u32 %v1141, 2147483648
    %v1146 = vxor.u32 %v1142, 2147483648
    %v1147 = vxor.u32 %v1143, 2147483648
    %v1148 = vmul.f32 %v1145, 1.442695
    %v1149 = vpow.pop %v1148
    %v1150 = vmul.f32 %v1146, 1.442695
    %v1151 = vpow.pop %v1150
    %v1152 = vmul.f32 %v1147, 1.442695
    %v1153 = vpow.pop %v1152
    %v1154 = vadd.f32 %v1149, 1.0
    %v1155 = vadd.f32 %v1151, 1.0
    %v1156 = vadd.f32 %v1153, 1.0
    %v1157 = vrcp.pop %v1154
    %v1158 = vmul.f32 1.0, %v1157
    %v1159 = vrcp.pop %v1155
    %v1160 = vmul.f32 1.0, %v1159
    %v1161 = vrcp.pop %v1156
    %v1162 = vmul.f32 1.0, %v1161
    %v1163 = vtanh.pop %v1144
    %v1164 = vmul.f32 %v1160, %v1051
    %v1165 = vmul.f32 %v1158, %v1163
    %v1166 = vadd.f32 %v1164, %v1165
    %v1167 = vtanh.pop %v1166
    %v1168 = vmul.f32 %v1162, %v1167
    %v1169 = vld [vmem:[#allocation2 + $0x60] sm:$0xff]
    %v1170 = vld [vmem:[#allocation2 + $0x68] sm:$0xff]
    %v1171 = vld [vmem:[#allocation2 + $0x70] sm:$0xff]
    %v1172 = vld [vmem:[#allocation2 + $0x78] sm:$0xff]
    %v1173 = vpack.c.bf16 %v1168, %v1168
    %1174 = vmatprep.subr.bf16.mxu0 %v766
    %1175 = vmatpush1.bf16.msra.mxu0 %v765
    %1176 = vmatprep.subr.bf16.mxu0 %v770
    %1177 = vmatpush1.bf16.msra.mxu0 %v769
    %1178 = vmatprep.subr.bf16.mxu0 %v774
    %1179 = vmatpush1.bf16.msra.mxu0 %v773
    %1180 = vmatprep.subr.bf16.mxu0 %v778
    %1181 = vmatpush1.bf16.msra.mxu0 %v777
    %1182 = vmatprep.subr.bf16.mxu0 %v782
    %1183 = vmatpush1.bf16.msra.mxu0 %v781
    %1184 = vmatprep.subr.bf16.mxu0 %v786
    %1185 = vmatpush1.bf16.msra.mxu0 %v785
    %1186 = vmatprep.subr.bf16.mxu0 %v790
    %1187 = vmatpush1.bf16.msra.mxu0 %v789
    %1188 = vmatprep.subr.bf16.mxu0 %v794
    %1189 = vmatpush1.bf16.msra.mxu0 %v793
    %1190 = vmatprep.subr.bf16.mxu0 0
    %1191 = vmatpush1.bf16.msra.mxu0 0
    %1192 = vmatprep.subr.bf16.mxu0 0
    %1193 = vmatpush1.bf16.msra.mxu0 0
    %1194 = vmatprep.subr.bf16.mxu0 0
    %1195 = vmatpush1.bf16.msra.mxu0 0
    %1196 = vmatprep.subr.bf16.mxu0 0
    %1197 = vmatpush1.bf16.msra.mxu0 0
    %1198 = vmatprep.subr.bf16.mxu0 0
    %1199 = vmatpush1.bf16.msra.mxu0 0
    %1200 = vmatprep.subr.bf16.mxu0 0
    %1201 = vmatpush1.bf16.msra.mxu0 0
    %1202 = vmatprep.subr.bf16.mxu0 0
    %1203 = vmatpush1.bf16.msra.mxu0 0
    %1204 = vmatprep.subr.bf16.mxu0 0
    %1205 = vmatpush1.bf16.msra.mxu0 0
    %1206 = vmatprep.mubr.bf16.mxu0 0
    %1207 = vmatmul.mubr.bf16.gmra.mrb[0].mxu0 %v1173
    %v1208 = vpop.f32.mrb[0].mxu0
    %v1209 = vadd.f32 0.0, %v1208
    %v1210 = vpop.f32.mrb[0].mxu0
    %v1211 = vadd.f32 0.0, %v1210
    %v1212 = vpop.f32.mrb[0].mxu0
    %v1213 = vpop.f32.mrb[0].mxu0
    %1214 = vdwg.mxu0
    %1215 = vmatprep.subr.bf16.mxu0 %v768
    %1216 = vmatpush1.bf16.msra.mxu0 %v767
    %1217 = vmatprep.subr.bf16.mxu0 %v772
    %1218 = vmatpush1.bf16.msra.mxu0 %v771
    %1219 = vmatprep.subr.bf16.mxu0 %v776
    %1220 = vmatpush1.bf16.msra.mxu0 %v775
    %1221 = vmatprep.subr.bf16.mxu0 %v780
    %1222 = vmatpush1.bf16.msra.mxu0 %v779
    %1223 = vmatprep.subr.bf16.mxu0 %v784
    %1224 = vmatpush1.bf16.msra.mxu0 %v783
    %1225 = vmatprep.subr.bf16.mxu0 %v788
    %1226 = vmatpush1.bf16.msra.mxu0 %v787
    %1227 = vmatprep.subr.bf16.mxu0 %v792
    %1228 = vmatpush1.bf16.msra.mxu0 %v791
    %1229 = vmatprep.subr.bf16.mxu0 %v796
    %1230 = vmatpush1.bf16.msra.mxu0 %v795
    %1231 = vmatprep.subr.bf16.mxu0 0
    %1232 = vmatpush1.bf16.msra.mxu0 0
    %1233 = vmatprep.subr.bf16.mxu0 0
    %1234 = vmatpush1.bf16.msra.mxu0 0
    %1235 = vmatprep.subr.bf16.mxu0 0
    %1236 = vmatpush1.bf16.msra.mxu0 0
    %1237 = vmatprep.subr.bf16.mxu0 0
    %1238 = vmatpush1.bf16.msra.mxu0 0
    %1239 = vmatprep.subr.bf16.mxu0 0
    %1240 = vmatpush1.bf16.msra.mxu0 0
    %1241 = vmatprep.subr.bf16.mxu0 0
    %1242 = vmatpush1.bf16.msra.mxu0 0
    %1243 = vmatprep.subr.bf16.mxu0 0
    %1244 = vmatpush1.bf16.msra.mxu0 0
    %1245 = vmatprep.subr.bf16.mxu0 0
    %1246 = vmatpush1.bf16.msra.mxu0 0
    %1247 = vmatprep.mubr.bf16.mxu0 0
    %1248 = vmatmul.mubr.bf16.gmra.mrb[0].mxu0 %v1173
    %v1249 = vpop.f32.mrb[0].mxu0
    %v1250 = vadd.f32 0.0, %v1249
    %v1251 = vpop.f32.mrb[0].mxu0
    %v1252 = vadd.f32 0.0, %v1251
    %v1253 = vpop.f32.mrb[0].mxu0
    %v1254 = vpop.f32.mrb[0].mxu0
    %1255 = vdwg.mxu0
    %v1256 = vadd.f32 %v1169, %v1209
    %v1257 = vadd.f32 %v1170, %v1211
    %v1258 = vadd.f32 %v1171, %v1250
    %v1259 = vadd.f32 %v1172, %v1252
    %v1260 = vxor.u32 %v1256, 2147483648
    %v1261 = vxor.u32 %v1257, 2147483648
    %v1262 = vxor.u32 %v1258, 2147483648
    %v1263 = vmul.f32 %v1260, 1.442695
    %v1264 = vpow.pop %v1263
    %v1265 = vmul.f32 %v1261, 1.442695
    %v1266 = vpow.pop %v1265
    %v1267 = vmul.f32 %v1262, 1.442695
    %v1268 = vpow.pop %v1267
    %v1269 = vadd.f32 %v1264, 1.0
    %v1270 = vadd.f32 %v1266, 1.0
    %v1271 = vadd.f32 %v1268, 1.0
    %v1272 = vrcp.pop %v1269
    %v1273 = vmul.f32 1.0, %v1272
    %v1274 = vrcp.pop %v1270
    %v1275 = vmul.f32 1.0, %v1274
    %v1276 = vrcp.pop %v1271
    %v1277 = vmul.f32 1.0, %v1276
    %v1278 = vtanh.pop %v1259
    %v1279 = vmul.f32 %v1275, %v1166
    %v1280 = vmul.f32 %v1273, %v1278
    %v1281 = vadd.f32 %v1279, %v1280
    %v1282 = vtanh.pop %v1281
    %v1283 = vmul.f32 %v1277, %v1282
    %v1285 = vsel %vm141, %v257, 0
    %v1288 = vsel %vm141, %v258, 0
    %1290 = vmatprep.subr.bf16.mxu0 %v378
    %1291 = vmatpush1.bf16.msra.mxu0 %v377
    %1292 = vmatprep.subr.bf16.mxu0 %v382
    %1293 = vmatpush1.bf16.msra.mxu0 %v381
    %1294 = vmatprep.subr.bf16.mxu0 %v386
    %1295 = vmatpush1.bf16.msra.mxu0 %v385
    %1296 = vmatprep.subr.bf16.mxu0 %v390
    %1297 = vmatpush1.bf16.msra.mxu0 %v389
    %1298 = vmatprep.subr.bf16.mxu0 0
    %1299 = vmatpush1.bf16.msra.mxu0 0
    %1300 = vmatprep.subr.bf16.mxu0 0
    %1301 = vmatpush1.bf16.msra.mxu0 0
    %1302 = vmatprep.subr.bf16.mxu0 0
    %1303 = vmatpush1.bf16.msra.mxu0 0
    %1304 = vmatprep.subr.bf16.mxu0 0
    %1305 = vmatpush1.bf16.msra.mxu0 0
    %1306 = vmatprep.subr.bf16.mxu0 0
    %1307 = vmatpush1.bf16.msra.mxu0 0
    %1308 = vmatprep.subr.bf16.mxu0 0
    %1309 = vmatpush1.bf16.msra.mxu0 0
    %1310 = vmatprep.subr.bf16.mxu0 0
    %1311 = vmatpush1.bf16.msra.mxu0 0
    %1312 = vmatprep.subr.bf16.mxu0 0
    %1313 = vmatpush1.bf16.msra.mxu0 0
    %1314 = vmatprep.subr.bf16.mxu0 0
    %1315 = vmatpush1.bf16.msra.mxu0 0
    %1316 = vmatprep.subr.bf16.mxu0 0
    %1317 = vmatpush1.bf16.msra.mxu0 0
    %1318 = vmatprep.subr.bf16.mxu0 0
    %1319 = vmatpush1.bf16.msra.mxu0 0
    %1320 = vmatprep.subr.bf16.mxu0 0
    %1321 = vmatpush1.bf16.msra.mxu0 0
    %1322 = vmatprep.mubr.bf16.mxu0 0
    %1323 = vmatmul.mubr.bf16.gmra.mrb[0].mxu0 %v1285
    %v1324 = vpop.f32.mrb[0].mxu0
    %v1325 = vadd.f32 %v312, %v1324
    %v1326 = vpop.f32.mrb[0].mxu0
    %v1327 = vadd.f32 %v316, %v1326
    %v1328 = vpop.f32.mrb[0].mxu0
    %v1329 = vadd.f32 %v312, %v1328
    %v1330 = vpop.f32.mrb[0].mxu0
    %v1331 = vadd.f32 %v316, %v1330
    %1332 = vmatprep.mubr.bf16.mxu0 0
    %1333 = vmatmul.mubr.bf16.gmra.mrb[0].mxu0 %v1288
    %v1334 = vpop.f32.mrb[0].mxu0
    %v1335 = vadd.f32 %v312, %v1334
    %v1336 = vpop.f32.mrb[0].mxu0
    %v1337 = vadd.f32 %v316, %v1336
    %v1338 = vpop.f32.mrb[0].mxu0
    %v1339 = vadd.f32 %v312, %v1338
    %v1340 = vpop.f32.mrb[0].mxu0
    %v1341 = vadd.f32 %v316, %v1340
    %1342 = vdwg.mxu0
    %1343 = vmatprep.subr.bf16.mxu0 %v380
    %1344 = vmatpush1.bf16.msra.mxu0 %v379
    %1345 = vmatprep.subr.bf16.mxu0 %v384
    %1346 = vmatpush1.bf16.msra.mxu0 %v383
    %1347 = vmatprep.subr.bf16.mxu0 %v388
    %1348 = vmatpush1.bf16.msra.mxu0 %v387
    %1349 = vmatprep.subr.bf16.mxu0 %v392
    %1350 = vmatpush1.bf16.msra.mxu0 %v391
    %1351 = vmatprep.subr.bf16.mxu0 0
    %1352 = vmatpush1.bf16.msra.mxu0 0
    %1353 = vmatprep.subr.bf16.mxu0 0
    %1354 = vmatpush1.bf16.msra.mxu0 0
    %1355 = vmatprep.subr.bf16.mxu0 0
    %1356 = vmatpush1.bf16.msra.mxu0 0
    %1357 = vmatprep.subr.bf16.mxu0 0
    %1358 = vmatpush1.bf16.msra.mxu0 0
    %1359 = vmatprep.subr.bf16.mxu0 0
    %1360 = vmatpush1.bf16.msra.mxu0 0
    %1361 = vmatprep.subr.bf16.mxu0 0
    %1362 = vmatpush1.bf16.msra.mxu0 0
    %1363 = vmatprep.subr.bf16.mxu0 0
    %1364 = vmatpush1.bf16.msra.mxu0 0
    %1365 = vmatprep.subr.bf16.mxu0 0
    %1366 = vmatpush1.bf16.msra.mxu0 0
    %1367 = vmatprep.subr.bf16.mxu0 0
    %1368 = vmatpush1.bf16.msra.mxu0 0
    %1369 = vmatprep.subr.bf16.mxu0 0
    %1370 = vmatpush1.bf16.msra.mxu0 0
    %1371 = vmatprep.subr.bf16.mxu0 0
    %1372 = vmatpush1.bf16.msra.mxu0 0
    %1373 = vmatprep.subr.bf16.mxu0 0
    %1374 = vmatpush1.bf16.msra.mxu0 0
    %1375 = vmatprep.mubr.bf16.mxu0 0
    %1376 = vmatmul.mubr.bf16.gmra.mrb[0].mxu0 %v1285
    %v1377 = vpop.f32.mrb[0].mxu0
    %v1378 = vadd.f32 %v320, %v1377
    %v1379 = vpop.f32.mrb[0].mxu0
    %v1380 = vadd.f32 %v324, %v1379
    %v1381 = vpop.f32.mrb[0].mxu0
    %v1382 = vadd.f32 %v320, %v1381
    %v1383 = vpop.f32.mrb[0].mxu0
    %v1384 = vadd.f32 %v324, %v1383
    %1385 = vmatprep.mubr.bf16.mxu0 0
    %1386 = vmatmul.mubr.bf16.gmra.mrb[0].mxu0 %v1288
    %v1387 = vpop.f32.mrb[0].mxu0
    %v1388 = vadd.f32 %v320, %v1387
    %v1389 = vpop.f32.mrb[0].mxu0
    %v1390 = vadd.f32 %v324, %v1389
    %v1391 = vpop.f32.mrb[0].mxu0
    %v1392 = vadd.f32 %v320, %v1391
    %v1393 = vpop.f32.mrb[0].mxu0
    %v1394 = vadd.f32 %v324, %v1393
    %1395 = vdwg.mxu0
    %1396 = vst [vmem:[#allocation2 + $0x100] sm:$0xff] %v1325
    %1397 = vst [vmem:[#allocation2 + $0x108] sm:$0xff] %v1327
    %1398 = vst [vmem:[#allocation2 + $0x110] sm:$0xff] %v1378
    %1399 = vst [vmem:[#allocation2 + $0x118] sm:$0xff] %v1380
    %1400 = vst [vmem:[#allocation2 + $0x120] sm:$0xff] %v1329
    %1401 = vst [vmem:[#allocation2 + $0x128] sm:$0xff] %v1331
    %1402 = vst [vmem:[#allocation2 + $0x130] sm:$0xff] %v1382
    %1403 = vst [vmem:[#allocation2 + $0x138] sm:$0xff] %v1384
    %1404 = vst [vmem:[#allocation2 + $0x140] sm:$0xff] %v1335
    %1405 = vst [vmem:[#allocation2 + $0x148] sm:$0xff] %v1337
    %1406 = vst [vmem:[#allocation2 + $0x150] sm:$0xff] %v1388
    %1407 = vst [vmem:[#allocation2 + $0x158] sm:$0xff] %v1390
    %1408 = vst [vmem:[#allocation2 + $0x160] sm:$0xff] %v1339
    %1409 = vst [vmem:[#allocation2 + $0x168] sm:$0xff] %v1341
    %1410 = vst [vmem:[#allocation2 + $0x170] sm:$0xff] %v1392
    %1411 = vst [vmem:[#allocation2 + $0x178] sm:$0xff] %v1394
    %v1412 = vld [vmem:[#allocation2 + $0x80] sm:$0xff]
    %v1413 = vld [vmem:[#allocation2 + $0x88] sm:$0xff]
    %v1414 = vld [vmem:[#allocation2 + $0x90] sm:$0xff]
    %v1415 = vld [vmem:[#allocation2 + $0x98] sm:$0xff]
    %v1416 = vpack.c.bf16 %v1283, %v1283
    %1417 = vmatprep.subr.bf16.mxu0 %v766
    %1418 = vmatpush1.bf16.msra.mxu0 %v765
    %1419 = vmatprep.subr.bf16.mxu0 %v770
    %1420 = vmatpush1.bf16.msra.mxu0 %v769
    %1421 = vmatprep.subr.bf16.mxu0 %v774
    %1422 = vmatpush1.bf16.msra.mxu0 %v773
    %1423 = vmatprep.subr.bf16.mxu0 %v778
    %1424 = vmatpush1.bf16.msra.mxu0 %v777
    %1425 = vmatprep.subr.bf16.mxu0 %v782
    %1426 = vmatpush1.bf16.msra.mxu0 %v781
    %1427 = vmatprep.subr.bf16.mxu0 %v786
    %1428 = vmatpush1.bf16.msra.mxu0 %v785
    %1429 = vmatprep.subr.bf16.mxu0 %v790
    %1430 = vmatpush1.bf16.msra.mxu0 %v789
    %1431 = vmatprep.subr.bf16.mxu0 %v794
    %1432 = vmatpush1.bf16.msra.mxu0 %v793
    %1433 = vmatprep.subr.bf16.mxu0 0
    %1434 = vmatpush1.bf16.msra.mxu0 0
    %1435 = vmatprep.subr.bf16.mxu0 0
    %1436 = vmatpush1.bf16.msra.mxu0 0
    %1437 = vmatprep.subr.bf16.mxu0 0
    %1438 = vmatpush1.bf16.msra.mxu0 0
    %1439 = vmatprep.subr.bf16.mxu0 0
    %1440 = vmatpush1.bf16.msra.mxu0 0
    %1441 = vmatprep.subr.bf16.mxu0 0
    %1442 = vmatpush1.bf16.msra.mxu0 0
    %1443 = vmatprep.subr.bf16.mxu0 0
    %1444 = vmatpush1.bf16.msra.mxu0 0
    %1445 = vmatprep.subr.bf16.mxu0 0
    %1446 = vmatpush1.bf16.msra.mxu0 0
    %1447 = vmatprep.subr.bf16.mxu0 0
    %1448 = vmatpush1.bf16.msra.mxu0 0
    %1449 = vmatprep.mubr.bf16.mxu0 0
    %1450 = vmatmul.mubr.bf16.gmra.mrb[0].mxu0 %v1416
    %v1451 = vpop.f32.mrb[0].mxu0
    %v1452 = vadd.f32 0.0, %v1451
    %v1453 = vpop.f32.mrb[0].mxu0
    %v1454 = vadd.f32 0.0, %v1453
    %v1455 = vpop.f32.mrb[0].mxu0
    %v1456 = vpop.f32.mrb[0].mxu0
    %1457 = vdwg.mxu0
    %1458 = vmatprep.subr.bf16.mxu0 %v768
    %1459 = vmatpush1.bf16.msra.mxu0 %v767
    %1460 = vmatprep.subr.bf16.mxu0 %v772
    %1461 = vmatpush1.bf16.msra.mxu0 %v771
    %1462 = vmatprep.subr.bf16.mxu0 %v776
    %1463 = vmatpush1.bf16.msra.mxu0 %v775
    %1464 = vmatprep.subr.bf16.mxu0 %v780
    %1465 = vmatpush1.bf16.msra.mxu0 %v779
    %1466 = vmatprep.subr.bf16.mxu0 %v784
    %1467 = vmatpush1.bf16.msra.mxu0 %v783
    %1468 = vmatprep.subr.bf16.mxu0 %v788
    %1469 = vmatpush1.bf16.msra.mxu0 %v787
    %1470 = vmatprep.subr.bf16.mxu0 %v792
    %1471 = vmatpush1.bf16.msra.mxu0 %v791
    %1472 = vmatprep.subr.bf16.mxu0 %v796
    %1473 = vmatpush1.bf16.msra.mxu0 %v795
    %1474 = vmatprep.subr.bf16.mxu0 0
    %1475 = vmatpush1.bf16.msra.mxu0 0
    %1476 = vmatprep.subr.bf16.mxu0 0
    %1477 = vmatpush1.bf16.msra.mxu0 0
    %1478 = vmatprep.subr.bf16.mxu0 0
    %1479 = vmatpush1.bf16.msra.mxu0 0
    %1480 = vmatprep.subr.bf16.mxu0 0
    %1481 = vmatpush1.bf16.msra.mxu0 0
    %1482 = vmatprep.subr.bf16.mxu0 0
    %1483 = vmatpush1.bf16.msra.mxu0 0
    %1484 = vmatprep.subr.bf16.mxu0 0
    %1485 = vmatpush1.bf16.msra.mxu0 0
    %1486 = vmatprep.subr.bf16.mxu0 0
    %1487 = vmatpush1.bf16.msra.mxu0 0
    %1488 = vmatprep.subr.bf16.mxu0 0
    %1489 = vmatpush1.bf16.msra.mxu0 0
    %1490 = vmatprep.mubr.bf16.mxu0 0
    %1491 = vmatmul.mubr.bf16.gmra.mrb[0].mxu0 %v1416
    %v1492 = vpop.f32.mrb[0].mxu0
    %v1493 = vadd.f32 0.0, %v1492
    %v1494 = vpop.f32.mrb[0].mxu0
    %v1495 = vadd.f32 0.0, %v1494
    %v1496 = vpop.f32.mrb[0].mxu0
    %v1497 = vpop.f32.mrb[0].mxu0
    %1498 = vdwg.mxu0
    %v1499 = vadd.f32 %v1412, %v1452
    %v1500 = vadd.f32 %v1413, %v1454
    %v1501 = vadd.f32 %v1414, %v1493
    %v1502 = vadd.f32 %v1415, %v1495
    %v1503 = vxor.u32 %v1499, 2147483648
    %v1504 = vxor.u32 %v1500, 2147483648
    %v1505 = vxor.u32 %v1501, 2147483648
    %v1506 = vmul.f32 %v1503, 1.442695
    %v1507 = vpow.pop %v1506
    %v1508 = vmul.f32 %v1504, 1.442695
    %v1509 = vpow.pop %v1508
    %v1510 = vmul.f32 %v1505, 1.442695
    %v1511 = vpow.pop %v1510
    %v1512 = vadd.f32 %v1507, 1.0
    %v1513 = vadd.f32 %v1509, 1.0
    %v1514 = vadd.f32 %v1511, 1.0
    %v1515 = vrcp.pop %v1512
    %v1516 = vmul.f32 1.0, %v1515
    %v1517 = vrcp.pop %v1513
    %v1518 = vmul.f32 1.0, %v1517
    %v1519 = vrcp.pop %v1514
    %v1520 = vmul.f32 1.0, %v1519
    %v1521 = vtanh.pop %v1502
    %v1522 = vmul.f32 %v1518, %v1281
    %v1523 = vmul.f32 %v1516, %v1521
    %v1524 = vadd.f32 %v1522, %v1523
    %v1525 = vtanh.pop %v1524
    %v1526 = vmul.f32 %v1520, %v1525
    %v1527 = vld [vmem:[#allocation2 + $0xa0] sm:$0xff]
    %v1528 = vld [vmem:[#allocation2 + $0xa8] sm:$0xff]
    %v1529 = vld [vmem:[#allocation2 + $0xb0] sm:$0xff]
    %v1530 = vld [vmem:[#allocation2 + $0xb8] sm:$0xff]
    %v1531 = vpack.c.bf16 %v1526, %v1526
    %1532 = vmatprep.subr.bf16.mxu0 %v766
    %1533 = vmatpush1.bf16.msra.mxu0 %v765
    %1534 = vmatprep.subr.bf16.mxu0 %v770
    %1535 = vmatpush1.bf16.msra.mxu0 %v769
    %1536 = vmatprep.subr.bf16.mxu0 %v774
    %1537 = vmatpush1.bf16.msra.mxu0 %v773
    %1538 = vmatprep.subr.bf16.mxu0 %v778
    %1539 = vmatpush1.bf16.msra.mxu0 %v777
    %1540 = vmatprep.subr.bf16.mxu0 %v782
    %1541 = vmatpush1.bf16.msra.mxu0 %v781
    %1542 = vmatprep.subr.bf16.mxu0 %v786
    %1543 = vmatpush1.bf16.msra.mxu0 %v785
    %1544 = vmatprep.subr.bf16.mxu0 %v790
    %1545 = vmatpush1.bf16.msra.mxu0 %v789
    %1546 = vmatprep.subr.bf16.mxu0 %v794
    %1547 = vmatpush1.bf16.msra.mxu0 %v793
    %1548 = vmatprep.subr.bf16.mxu0 0
    %1549 = vmatpush1.bf16.msra.mxu0 0
    %1550 = vmatprep.subr.bf16.mxu0 0
    %1551 = vmatpush1.bf16.msra.mxu0 0
    %1552 = vmatprep.subr.bf16.mxu0 0
    %1553 = vmatpush1.bf16.msra.mxu0 0
    %1554 = vmatprep.subr.bf16.mxu0 0
    %1555 = vmatpush1.bf16.msra.mxu0 0
    %1556 = vmatprep.subr.bf16.mxu0 0
    %1557 = vmatpush1.bf16.msra.mxu0 0
    %1558 = vmatprep.subr.bf16.mxu0 0
    %1559 = vmatpush1.bf16.msra.mxu0 0
    %1560 = vmatprep.subr.bf16.mxu0 0
    %1561 = vmatpush1.bf16.msra.mxu0 0
    %1562 = vmatprep.subr.bf16.mxu0 0
    %1563 = vmatpush1.bf16.msra.mxu0 0
    %1564 = vmatprep.mubr.bf16.mxu0 0
    %1565 = vmatmul.mubr.bf16.gmra.mrb[0].mxu0 %v1531
    %v1566 = vpop.f32.mrb[0].mxu0
    %v1567 = vadd.f32 0.0, %v1566
    %v1568 = vpop.f32.mrb[0].mxu0
    %v1569 = vadd.f32 0.0, %v1568
    %v1570 = vpop.f32.mrb[0].mxu0
    %v1571 = vpop.f32.mrb[0].mxu0
    %1572 = vdwg.mxu0
    %1573 = vmatprep.subr.bf16.mxu0 %v768
    %1574 = vmatpush1.bf16.msra.mxu0 %v767
    %1575 = vmatprep.subr.bf16.mxu0 %v772
    %1576 = vmatpush1.bf16.msra.mxu0 %v771
    %1577 = vmatprep.subr.bf16.mxu0 %v776
    %1578 = vmatpush1.bf16.msra.mxu0 %v775
    %1579 = vmatprep.subr.bf16.mxu0 %v780
    %1580 = vmatpush1.bf16.msra.mxu0 %v779
    %1581 = vmatprep.subr.bf16.mxu0 %v784
    %1582 = vmatpush1.bf16.msra.mxu0 %v783
    %1583 = vmatprep.subr.bf16.mxu0 %v788
    %1584 = vmatpush1.bf16.msra.mxu0 %v787
    %1585 = vmatprep.subr.bf16.mxu0 %v792
    %1586 = vmatpush1.bf16.msra.mxu0 %v791
    %1587 = vmatprep.subr.bf16.mxu0 %v796
    %1588 = vmatpush1.bf16.msra.mxu0 %v795
    %1589 = vmatprep.subr.bf16.mxu0 0
    %1590 = vmatpush1.bf16.msra.mxu0 0
    %1591 = vmatprep.subr.bf16.mxu0 0
    %1592 = vmatpush1.bf16.msra.mxu0 0
    %1593 = vmatprep.subr.bf16.mxu0 0
    %1594 = vmatpush1.bf16.msra.mxu0 0
    %1595 = vmatprep.subr.bf16.mxu0 0
    %1596 = vmatpush1.bf16.msra.mxu0 0
    %1597 = vmatprep.subr.bf16.mxu0 0
    %1598 = vmatpush1.bf16.msra.mxu0 0
    %1599 = vmatprep.subr.bf16.mxu0 0
    %1600 = vmatpush1.bf16.msra.mxu0 0
    %1601 = vmatprep.subr.bf16.mxu0 0
    %1602 = vmatpush1.bf16.msra.mxu0 0
    %1603 = vmatprep.subr.bf16.mxu0 0
    %1604 = vmatpush1.bf16.msra.mxu0 0
    %1605 = vmatprep.mubr.bf16.mxu0 0
    %1606 = vmatmul.mubr.bf16.gmra.mrb[0].mxu0 %v1531
    %v1607 = vpop.f32.mrb[0].mxu0
    %v1608 = vadd.f32 0.0, %v1607
    %v1609 = vpop.f32.mrb[0].mxu0
    %v1610 = vadd.f32 0.0, %v1609
    %v1611 = vpop.f32.mrb[0].mxu0
    %v1612 = vpop.f32.mrb[0].mxu0
    %1613 = vdwg.mxu0
    %v1614 = vadd.f32 %v1527, %v1567
    %v1615 = vadd.f32 %v1528, %v1569
    %v1616 = vadd.f32 %v1529, %v1608
    %v1617 = vadd.f32 %v1530, %v1610
    %v1618 = vxor.u32 %v1614, 2147483648
    %v1619 = vxor.u32 %v1615, 2147483648
    %v1620 = vxor.u32 %v1616, 2147483648
    %v1621 = vmul.f32 %v1618, 1.442695
    %v1622 = vpow.pop %v1621
    %v1623 = vmul.f32 %v1619, 1.442695
    %v1624 = vpow.pop %v1623
    %v1625 = vmul.f32 %v1620, 1.442695
    %v1626 = vpow.pop %v1625
    %v1627 = vadd.f32 %v1622, 1.0
    %v1628 = vadd.f32 %v1624, 1.0
    %v1629 = vadd.f32 %v1626, 1.0
    %v1630 = vrcp.pop %v1627
    %v1631 = vmul.f32 1.0, %v1630
    %v1632 = vrcp.pop %v1628
    %v1633 = vmul.f32 1.0, %v1632
    %v1634 = vrcp.pop %v1629
    %v1635 = vmul.f32 1.0, %v1634
    %v1636 = vtanh.pop %v1617
    %v1637 = vmul.f32 %v1633, %v1524
    %v1638 = vmul.f32 %v1631, %v1636
    %v1639 = vadd.f32 %v1637, %v1638
    %v1640 = vtanh.pop %v1639
    %v1641 = vmul.f32 %v1635, %v1640
    %v1642 = vld [vmem:[#allocation2 + $0xc0] sm:$0xff]
    %v1643 = vld [vmem:[#allocation2 + $0xc8] sm:$0xff]
    %v1644 = vld [vmem:[#allocation2 + $0xd0] sm:$0xff]
    %v1645 = vld [vmem:[#allocation2 + $0xd8] sm:$0xff]
    %v1646 = vpack.c.bf16 %v1641, %v1641
    %1647 = vmatprep.subr.bf16.mxu0 %v766
    %1648 = vmatpush1.bf16.msra.mxu0 %v765
    %1649 = vmatprep.subr.bf16.mxu0 %v770
    %1650 = vmatpush1.bf16.msra.mxu0 %v769
    %1651 = vmatprep.subr.bf16.mxu0 %v774
    %1652 = vmatpush1.bf16.msra.mxu0 %v773
    %1653 = vmatprep.subr.bf16.mxu0 %v778
    %1654 = vmatpush1.bf16.msra.mxu0 %v777
    %1655 = vmatprep.subr.bf16.mxu0 %v782
    %1656 = vmatpush1.bf16.msra.mxu0 %v781
    %1657 = vmatprep.subr.bf16.mxu0 %v786
    %1658 = vmatpush1.bf16.msra.mxu0 %v785
    %1659 = vmatprep.subr.bf16.mxu0 %v790
    %1660 = vmatpush1.bf16.msra.mxu0 %v789
    %1661 = vmatprep.subr.bf16.mxu0 %v794
    %1662 = vmatpush1.bf16.msra.mxu0 %v793
    %1663 = vmatprep.subr.bf16.mxu0 0
    %1664 = vmatpush1.bf16.msra.mxu0 0
    %1665 = vmatprep.subr.bf16.mxu0 0
    %1666 = vmatpush1.bf16.msra.mxu0 0
    %1667 = vmatprep.subr.bf16.mxu0 0
    %1668 = vmatpush1.bf16.msra.mxu0 0
    %1669 = vmatprep.subr.bf16.mxu0 0
    %1670 = vmatpush1.bf16.msra.mxu0 0
    %1671 = vmatprep.subr.bf16.mxu0 0
    %1672 = vmatpush1.bf16.msra.mxu0 0
    %1673 = vmatprep.subr.bf16.mxu0 0
    %1674 = vmatpush1.bf16.msra.mxu0 0
    %1675 = vmatprep.subr.bf16.mxu0 0
    %1676 = vmatpush1.bf16.msra.mxu0 0
    %1677 = vmatprep.subr.bf16.mxu0 0
    %1678 = vmatpush1.bf16.msra.mxu0 0
    %1679 = vmatprep.mubr.bf16.mxu0 0
    %1680 = vmatmul.mubr.bf16.gmra.mrb[0].mxu0 %v1646
    %v1681 = vpop.f32.mrb[0].mxu0
    %v1682 = vadd.f32 0.0, %v1681
    %v1683 = vpop.f32.mrb[0].mxu0
    %v1684 = vadd.f32 0.0, %v1683
    %v1685 = vpop.f32.mrb[0].mxu0
    %v1686 = vpop.f32.mrb[0].mxu0
    %1687 = vdwg.mxu0
    %1688 = vmatprep.subr.bf16.mxu0 %v768
    %1689 = vmatpush1.bf16.msra.mxu0 %v767
    %1690 = vmatprep.subr.bf16.mxu0 %v772
    %1691 = vmatpush1.bf16.msra.mxu0 %v771
    %1692 = vmatprep.subr.bf16.mxu0 %v776
    %1693 = vmatpush1.bf16.msra.mxu0 %v775
    %1694 = vmatprep.subr.bf16.mxu0 %v780
    %1695 = vmatpush1.bf16.msra.mxu0 %v779
    %1696 = vmatprep.subr.bf16.mxu0 %v784
    %1697 = vmatpush1.bf16.msra.mxu0 %v783
    %1698 = vmatprep.subr.bf16.mxu0 %v788
    %1699 = vmatpush1.bf16.msra.mxu0 %v787
    %1700 = vmatprep.subr.bf16.mxu0 %v792
    %1701 = vmatpush1.bf16.msra.mxu0 %v791
    %1702 = vmatprep.subr.bf16.mxu0 %v796
    %1703 = vmatpush1.bf16.msra.mxu0 %v795
    %1704 = vmatprep.subr.bf16.mxu0 0
    %1705 = vmatpush1.bf16.msra.mxu0 0
    %1706 = vmatprep.subr.bf16.mxu0 0
    %1707 = vmatpush1.bf16.msra.mxu0 0
    %1708 = vmatprep.subr.bf16.mxu0 0
    %1709 = vmatpush1.bf16.msra.mxu0 0
    %1710 = vmatprep.subr.bf16.mxu0 0
    %1711 = vmatpush1.bf16.msra.mxu0 0
    %1712 = vmatprep.subr.bf16.mxu0 0
    %1713 = vmatpush1.bf16.msra.mxu0 0
    %1714 = vmatprep.subr.bf16.mxu0 0
    %1715 = vmatpush1.bf16.msra.mxu0 0
    %1716 = vmatprep.subr.bf16.mxu0 0
    %1717 = vmatpush1.bf16.msra.mxu0 0
    %1718 = vmatprep.subr.bf16.mxu0 0
    %1719 = vmatpush1.bf16.msra.mxu0 0
    %1720 = vmatprep.mubr.bf16.mxu0 0
    %1721 = vmatmul.mubr.bf16.gmra.mrb[0].mxu0 %v1646
    %v1722 = vpop.f32.mrb[0].mxu0
    %v1723 = vadd.f32 0.0, %v1722
    %v1724 = vpop.f32.mrb[0].mxu0
    %v1725 = vadd.f32 0.0, %v1724
    %v1726 = vpop.f32.mrb[0].mxu0
    %v1727 = vpop.f32.mrb[0].mxu0
    %1728 = vdwg.mxu0
    %v1729 = vadd.f32 %v1642, %v1682
    %v1730 = vadd.f32 %v1643, %v1684
    %v1731 = vadd.f32 %v1644, %v1723
    %v1732 = vadd.f32 %v1645, %v1725
    %v1733 = vxor.u32 %v1729, 2147483648
    %v1734 = vxor.u32 %v1730, 2147483648
    %v1735 = vxor.u32 %v1731, 2147483648
    %v1736 = vmul.f32 %v1733, 1.442695
    %v1737 = vpow.pop %v1736
    %v1738 = vmul.f32 %v1734, 1.442695
    %v1739 = vpow.pop %v1738
    %v1740 = vmul.f32 %v1735, 1.442695
    %v1741 = vpow.pop %v1740
    %v1742 = vadd.f32 %v1737, 1.0
    %v1743 = vadd.f32 %v1739, 1.0
    %v1744 = vadd.f32 %v1741, 1.0
    %v1745 = vrcp.pop %v1742
    %v1746 = vmul.f32 1.0, %v1745
    %v1747 = vrcp.pop %v1743
    %v1748 = vmul.f32 1.0, %v1747
    %v1749 = vrcp.pop %v1744
    %v1750 = vmul.f32 1.0, %v1749
    %v1751 = vtanh.pop %v1732
    %v1752 = vmul.f32 %v1748, %v1639
    %v1753 = vmul.f32 %v1746, %v1751
    %v1754 = vadd.f32 %v1752, %v1753
    %v1755 = vtanh.pop %v1754
    %v1756 = vmul.f32 %v1750, %v1755
    %v1757 = vld [vmem:[#allocation2 + $0xe0] sm:$0xff]
    %v1758 = vld [vmem:[#allocation2 + $0xe8] sm:$0xff]
    %v1759 = vld [vmem:[#allocation2 + $0xf0] sm:$0xff]
    %v1760 = vld [vmem:[#allocation2 + $0xf8] sm:$0xff]
    %v1761 = vpack.c.bf16 %v1756, %v1756
    %1762 = vmatprep.subr.bf16.mxu0 %v766
    %1763 = vmatpush1.bf16.msra.mxu0 %v765
    %1764 = vmatprep.subr.bf16.mxu0 %v770
    %1765 = vmatpush1.bf16.msra.mxu0 %v769
    %1766 = vmatprep.subr.bf16.mxu0 %v774
    %1767 = vmatpush1.bf16.msra.mxu0 %v773
    %1768 = vmatprep.subr.bf16.mxu0 %v778
    %1769 = vmatpush1.bf16.msra.mxu0 %v777
    %1770 = vmatprep.subr.bf16.mxu0 %v782
    %1771 = vmatpush1.bf16.msra.mxu0 %v781
    %1772 = vmatprep.subr.bf16.mxu0 %v786
    %1773 = vmatpush1.bf16.msra.mxu0 %v785
    %1774 = vmatprep.subr.bf16.mxu0 %v790
    %1775 = vmatpush1.bf16.msra.mxu0 %v789
    %1776 = vmatprep.subr.bf16.mxu0 %v794
    %1777 = vmatpush1.bf16.msra.mxu0 %v793
    %1778 = vmatprep.subr.bf16.mxu0 0
    %1779 = vmatpush1.bf16.msra.mxu0 0
    %1780 = vmatprep.subr.bf16.mxu0 0
    %1781 = vmatpush1.bf16.msra.mxu0 0
    %1782 = vmatprep.subr.bf16.mxu0 0
    %1783 = vmatpush1.bf16.msra.mxu0 0
    %1784 = vmatprep.subr.bf16.mxu0 0
    %1785 = vmatpush1.bf16.msra.mxu0 0
    %1786 = vmatprep.subr.bf16.mxu0 0
    %1787 = vmatpush1.bf16.msra.mxu0 0
    %1788 = vmatprep.subr.bf16.mxu0 0
    %1789 = vmatpush1.bf16.msra.mxu0 0
    %1790 = vmatprep.subr.bf16.mxu0 0
    %1791 = vmatpush1.bf16.msra.mxu0 0
    %1792 = vmatprep.subr.bf16.mxu0 0
    %1793 = vmatpush1.bf16.msra.mxu0 0
    %1794 = vmatprep.mubr.bf16.mxu0 0
    %1795 = vmatmul.mubr.bf16.gmra.mrb[0].mxu0 %v1761
    %v1796 = vpop.f32.mrb[0].mxu0
    %v1797 = vadd.f32 0.0, %v1796
    %v1798 = vpop.f32.mrb[0].mxu0
    %v1799 = vadd.f32 0.0, %v1798
    %v1800 = vpop.f32.mrb[0].mxu0
    %v1801 = vpop.f32.mrb[0].mxu0
    %1802 = vdwg.mxu0
    %1803 = vmatprep.subr.bf16.mxu0 %v768
    %1804 = vmatpush1.bf16.msra.mxu0 %v767
    %1805 = vmatprep.subr.bf16.mxu0 %v772
    %1806 = vmatpush1.bf16.msra.mxu0 %v771
    %1807 = vmatprep.subr.bf16.mxu0 %v776
    %1808 = vmatpush1.bf16.msra.mxu0 %v775
    %1809 = vmatprep.subr.bf16.mxu0 %v780
    %1810 = vmatpush1.bf16.msra.mxu0 %v779
    %1811 = vmatprep.subr.bf16.mxu0 %v784
    %1812 = vmatpush1.bf16.msra.mxu0 %v783
    %1813 = vmatprep.subr.bf16.mxu0 %v788
    %1814 = vmatpush1.bf16.msra.mxu0 %v787
    %1815 = vmatprep.subr.bf16.mxu0 %v792
    %1816 = vmatpush1.bf16.msra.mxu0 %v791
    %1817 = vmatprep.subr.bf16.mxu0 %v796
    %1818 = vmatpush1.bf16.msra.mxu0 %v795
    %1819 = vmatprep.subr.bf16.mxu0 0
    %1820 = vmatpush1.bf16.msra.mxu0 0
    %1821 = vmatprep.subr.bf16.mxu0 0
    %1822 = vmatpush1.bf16.msra.mxu0 0
    %1823 = vmatprep.subr.bf16.mxu0 0
    %1824 = vmatpush1.bf16.msra.mxu0 0
    %1825 = vmatprep.subr.bf16.mxu0 0
    %1826 = vmatpush1.bf16.msra.mxu0 0
    %1827 = vmatprep.subr.bf16.mxu0 0
    %1828 = vmatpush1.bf16.msra.mxu0 0
    %1829 = vmatprep.subr.bf16.mxu0 0
    %1830 = vmatpush1.bf16.msra.mxu0 0
    %1831 = vmatprep.subr.bf16.mxu0 0
    %1832 = vmatpush1.bf16.msra.mxu0 0
    %1833 = vmatprep.subr.bf16.mxu0 0
    %1834 = vmatpush1.bf16.msra.mxu0 0
    %1835 = vmatprep.mubr.bf16.mxu0 0
    %1836 = vmatmul.mubr.bf16.gmra.mrb[0].mxu0 %v1761
    %v1837 = vpop.f32.mrb[0].mxu0
    %v1838 = vadd.f32 0.0, %v1837
    %v1839 = vpop.f32.mrb[0].mxu0
    %v1840 = vadd.f32 0.0, %v1839
    %v1841 = vpop.f32.mrb[0].mxu0
    %v1842 = vpop.f32.mrb[0].mxu0
    %1843 = vdwg.mxu0
    %v1844 = vadd.f32 %v1757, %v1797
    %v1845 = vadd.f32 %v1758, %v1799
    %v1846 = vadd.f32 %v1759, %v1838
    %v1847 = vadd.f32 %v1760, %v1840
    %v1848 = vxor.u32 %v1844, 2147483648
    %v1849 = vxor.u32 %v1845, 2147483648
    %v1850 = vxor.u32 %v1846, 2147483648
    %v1851 = vmul.f32 %v1848, 1.442695
    %v1852 = vpow.pop %v1851
    %v1853 = vmul.f32 %v1849, 1.442695
    %v1854 = vpow.pop %v1853
    %v1855 = vmul.f32 %v1850, 1.442695
    %v1856 = vpow.pop %v1855
    %v1857 = vadd.f32 %v1852, 1.0
    %v1858 = vadd.f32 %v1854, 1.0
    %v1859 = vadd.f32 %v1856, 1.0
    %v1860 = vrcp.pop %v1857
    %v1861 = vmul.f32 1.0, %v1860
    %v1862 = vrcp.pop %v1858
    %v1863 = vmul.f32 1.0, %v1862
    %v1864 = vrcp.pop %v1859
    %v1865 = vmul.f32 1.0, %v1864
    %v1866 = vtanh.pop %v1847
    %v1867 = vmul.f32 %v1863, %v1754
    %v1868 = vmul.f32 %v1861, %v1866
    %v1869 = vadd.f32 %v1867, %v1868
    %v1870 = vtanh.pop %v1869
    %v1871 = vmul.f32 %v1865, %v1870
    %v1872 = vld [vmem:[#allocation2 + $0x100] sm:$0xff]
    %v1873 = vld [vmem:[#allocation2 + $0x108] sm:$0xff]
    %v1874 = vld [vmem:[#allocation2 + $0x110] sm:$0xff]
    %v1875 = vld [vmem:[#allocation2 + $0x118] sm:$0xff]
    %v1876 = vpack.c.bf16 %v1871, %v1871
    %1877 = vmatprep.subr.bf16.mxu0 %v766
    %1878 = vmatpush1.bf16.msra.mxu0 %v765
    %1879 = vmatprep.subr.bf16.mxu0 %v770
    %1880 = vmatpush1.bf16.msra.mxu0 %v769
    %1881 = vmatprep.subr.bf16.mxu0 %v774
    %1882 = vmatpush1.bf16.msra.mxu0 %v773
    %1883 = vmatprep.subr.bf16.mxu0 %v778
    %1884 = vmatpush1.bf16.msra.mxu0 %v777
    %1885 = vmatprep.subr.bf16.mxu0 %v782
    %1886 = vmatpush1.bf16.msra.mxu0 %v781
    %1887 = vmatprep.subr.bf16.mxu0 %v786
    %1888 = vmatpush1.bf16.msra.mxu0 %v785
    %1889 = vmatprep.subr.bf16.mxu0 %v790
    %1890 = vmatpush1.bf16.msra.mxu0 %v789
    %1891 = vmatprep.subr.bf16.mxu0 %v794
    %1892 = vmatpush1.bf16.msra.mxu0 %v793
    %1893 = vmatprep.subr.bf16.mxu0 0
    %1894 = vmatpush1.bf16.msra.mxu0 0
    %1895 = vmatprep.subr.bf16.mxu0 0
    %1896 = vmatpush1.bf16.msra.mxu0 0
    %1897 = vmatprep.subr.bf16.mxu0 0
    %1898 = vmatpush1.bf16.msra.mxu0 0
    %1899 = vmatprep.subr.bf16.mxu0 0
    %1900 = vmatpush1.bf16.msra.mxu0 0
    %1901 = vmatprep.subr.bf16.mxu0 0
    %1902 = vmatpush1.bf16.msra.mxu0 0
    %1903 = vmatprep.subr.bf16.mxu0 0
    %1904 = vmatpush1.bf16.msra.mxu0 0
    %1905 = vmatprep.subr.bf16.mxu0 0
    %1906 = vmatpush1.bf16.msra.mxu0 0
    %1907 = vmatprep.subr.bf16.mxu0 0
    %1908 = vmatpush1.bf16.msra.mxu0 0
    %1909 = vmatprep.mubr.bf16.mxu0 0
    %1910 = vmatmul.mubr.bf16.gmra.mrb[0].mxu0 %v1876
    %v1911 = vpop.f32.mrb[0].mxu0
    %v1912 = vadd.f32 0.0, %v1911
    %v1913 = vpop.f32.mrb[0].mxu0
    %v1914 = vadd.f32 0.0, %v1913
    %v1915 = vpop.f32.mrb[0].mxu0
    %v1916 = vpop.f32.mrb[0].mxu0
    %1917 = vdwg.mxu0
    %1918 = vmatprep.subr.bf16.mxu0 %v768
    %1919 = vmatpush1.bf16.msra.mxu0 %v767
    %1920 = vmatprep.subr.bf16.mxu0 %v772
    %1921 = vmatpush1.bf16.msra.mxu0 %v771
    %1922 = vmatprep.subr.bf16.mxu0 %v776
    %1923 = vmatpush1.bf16.msra.mxu0 %v775
    %1924 = vmatprep.subr.bf16.mxu0 %v780
    %1925 = vmatpush1.bf16.msra.mxu0 %v779
    %1926 = vmatprep.subr.bf16.mxu0 %v784
    %1927 = vmatpush1.bf16.msra.mxu0 %v783
    %1928 = vmatprep.subr.bf16.mxu0 %v788
    %1929 = vmatpush1.bf16.msra.mxu0 %v787
    %1930 = vmatprep.subr.bf16.mxu0 %v792
    %1931 = vmatpush1.bf16.msra.mxu0 %v791
    %1932 = vmatprep.subr.bf16.mxu0 %v796
    %1933 = vmatpush1.bf16.msra.mxu0 %v795
    %1934 = vmatprep.subr.bf16.mxu0 0
    %1935 = vmatpush1.bf16.msra.mxu0 0
    %1936 = vmatprep.subr.bf16.mxu0 0
    %1937 = vmatpush1.bf16.msra.mxu0 0
    %1938 = vmatprep.subr.bf16.mxu0 0
    %1939 = vmatpush1.bf16.msra.mxu0 0
    %1940 = vmatprep.subr.bf16.mxu0 0
    %1941 = vmatpush1.bf16.msra.mxu0 0
    %1942 = vmatprep.subr.bf16.mxu0 0
    %1943 = vmatpush1.bf16.msra.mxu0 0
    %1944 = vmatprep.subr.bf16.mxu0 0
    %1945 = vmatpush1.bf16.msra.mxu0 0
    %1946 = vmatprep.subr.bf16.mxu0 0
    %1947 = vmatpush1.bf16.msra.mxu0 0
    %1948 = vmatprep.subr.bf16.mxu0 0
    %1949 = vmatpush1.bf16.msra.mxu0 0
    %1950 = vmatprep.mubr.bf16.mxu0 0
    %1951 = vmatmul.mubr.bf16.gmra.mrb[0].mxu0 %v1876
    %v1952 = vpop.f32.mrb[0].mxu0
    %v1953 = vadd.f32 0.0, %v1952
    %v1954 = vpop.f32.mrb[0].mxu0
    %v1955 = vadd.f32 0.0, %v1954
    %v1956 = vpop.f32.mrb[0].mxu0
    %v1957 = vpop.f32.mrb[0].mxu0
    %1958 = vdwg.mxu0
    %v1959 = vadd.f32 %v1872, %v1912
    %v1960 = vadd.f32 %v1873, %v1914
    %v1961 = vadd.f32 %v1874, %v1953
    %v1962 = vadd.f32 %v1875, %v1955
    %v1963 = vxor.u32 %v1959, 2147483648
    %v1964 = vxor.u32 %v1960, 2147483648
    %v1965 = vxor.u32 %v1961, 2147483648
    %v1966 = vmul.f32 %v1963, 1.442695
    %v1967 = vpow.pop %v1966
    %v1968 = vmul.f32 %v1964, 1.442695
    %v1969 = vpow.pop %v1968
    %v1970 = vmul.f32 %v1965, 1.442695
    %v1971 = vpow.pop %v1970
    %v1972 = vadd.f32 %v1967, 1.0
    %v1973 = vadd.f32 %v1969, 1.0
    %v1974 = vadd.f32 %v1971, 1.0
    %v1975 = vrcp.pop %v1972
    %v1976 = vmul.f32 1.0, %v1975
    %v1977 = vrcp.pop %v1973
    %v1978 = vmul.f32 1.0, %v1977
    %v1979 = vrcp.pop %v1974
    %v1980 = vmul.f32 1.0, %v1979
    %v1981 = vtanh.pop %v1962
    %v1982 = vmul.f32 %v1978, %v1869
    %v1983 = vmul.f32 %v1976, %v1981
    %v1984 = vadd.f32 %v1982, %v1983
    %v1985 = vtanh.pop %v1984
    %v1986 = vmul.f32 %v1980, %v1985
    %v1987 = vld [vmem:[#allocation2 + $0x120] sm:$0xff]
    %v1988 = vld [vmem:[#allocation2 + $0x128] sm:$0xff]
    %v1989 = vld [vmem:[#allocation2 + $0x130] sm:$0xff]
    %v1990 = vld [vmem:[#allocation2 + $0x138] sm:$0xff]
    %v1991 = vpack.c.bf16 %v1986, %v1986
    %1992 = vmatprep.subr.bf16.mxu0 %v766
    %1993 = vmatpush1.bf16.msra.mxu0 %v765
    %1994 = vmatprep.subr.bf16.mxu0 %v770
    %1995 = vmatpush1.bf16.msra.mxu0 %v769
    %1996 = vmatprep.subr.bf16.mxu0 %v774
    %1997 = vmatpush1.bf16.msra.mxu0 %v773
    %1998 = vmatprep.subr.bf16.mxu0 %v778
    %1999 = vmatpush1.bf16.msra.mxu0 %v777
    %2000 = vmatprep.subr.bf16.mxu0 %v782
    %2001 = vmatpush1.bf16.msra.mxu0 %v781
    %2002 = vmatprep.subr.bf16.mxu0 %v786
    %2003 = vmatpush1.bf16.msra.mxu0 %v785
    %2004 = vmatprep.subr.bf16.mxu0 %v790
    %2005 = vmatpush1.bf16.msra.mxu0 %v789
    %2006 = vmatprep.subr.bf16.mxu0 %v794
    %2007 = vmatpush1.bf16.msra.mxu0 %v793
    %2008 = vmatprep.subr.bf16.mxu0 0
    %2009 = vmatpush1.bf16.msra.mxu0 0
    %2010 = vmatprep.subr.bf16.mxu0 0
    %2011 = vmatpush1.bf16.msra.mxu0 0
    %2012 = vmatprep.subr.bf16.mxu0 0
    %2013 = vmatpush1.bf16.msra.mxu0 0
    %2014 = vmatprep.subr.bf16.mxu0 0
    %2015 = vmatpush1.bf16.msra.mxu0 0
    %2016 = vmatprep.subr.bf16.mxu0 0
    %2017 = vmatpush1.bf16.msra.mxu0 0
    %2018 = vmatprep.subr.bf16.mxu0 0
    %2019 = vmatpush1.bf16.msra.mxu0 0
    %2020 = vmatprep.subr.bf16.mxu0 0
    %2021 = vmatpush1.bf16.msra.mxu0 0
    %2022 = vmatprep.subr.bf16.mxu0 0
    %2023 = vmatpush1.bf16.msra.mxu0 0
    %2024 = vmatprep.mubr.bf16.mxu0 0
    %2025 = vmatmul.mubr.bf16.gmra.mrb[0].mxu0 %v1991
    %v2026 = vpop.f32.mrb[0].mxu0
    %v2027 = vadd.f32 0.0, %v2026
    %v2028 = vpop.f32.mrb[0].mxu0
    %v2029 = vadd.f32 0.0, %v2028
    %v2030 = vpop.f32.mrb[0].mxu0
    %v2031 = vpop.f32.mrb[0].mxu0
    %2032 = vdwg.mxu0
    %2033 = vmatprep.subr.bf16.mxu0 %v768
    %2034 = vmatpush1.bf16.msra.mxu0 %v767
    %2035 = vmatprep.subr.bf16.mxu0 %v772
    %2036 = vmatpush1.bf16.msra.mxu0 %v771
    %2037 = vmatprep.subr.bf16.mxu0 %v776
    %2038 = vmatpush1.bf16.msra.mxu0 %v775
    %2039 = vmatprep.subr.bf16.mxu0 %v780
    %2040 = vmatpush1.bf16.msra.mxu0 %v779
    %2041 = vmatprep.subr.bf16.mxu0 %v784
    %2042 = vmatpush1.bf16.msra.mxu0 %v783
    %2043 = vmatprep.subr.bf16.mxu0 %v788
    %2044 = vmatpush1.bf16.msra.mxu0 %v787
    %2045 = vmatprep.subr.bf16.mxu0 %v792
    %2046 = vmatpush1.bf16.msra.mxu0 %v791
    %2047 = vmatprep.subr.bf16.mxu0 %v796
    %2048 = vmatpush1.bf16.msra.mxu0 %v795
    %2049 = vmatprep.subr.bf16.mxu0 0
    %2050 = vmatpush1.bf16.msra.mxu0 0
    %2051 = vmatprep.subr.bf16.mxu0 0
    %2052 = vmatpush1.bf16.msra.mxu0 0
    %2053 = vmatprep.subr.bf16.mxu0 0
    %2054 = vmatpush1.bf16.msra.mxu0 0
    %2055 = vmatprep.subr.bf16.mxu0 0
    %2056 = vmatpush1.bf16.msra.mxu0 0
    %2057 = vmatprep.subr.bf16.mxu0 0
    %2058 = vmatpush1.bf16.msra.mxu0 0
    %2059 = vmatprep.subr.bf16.mxu0 0
    %2060 = vmatpush1.bf16.msra.mxu0 0
    %2061 = vmatprep.subr.bf16.mxu0 0
    %2062 = vmatpush1.bf16.msra.mxu0 0
    %2063 = vmatprep.subr.bf16.mxu0 0
    %2064 = vmatpush1.bf16.msra.mxu0 0
    %2065 = vmatprep.mubr.bf16.mxu0 0
    %2066 = vmatmul.mubr.bf16.gmra.mrb[0].mxu0 %v1991
    %v2067 = vpop.f32.mrb[0].mxu0
    %v2068 = vadd.f32 0.0, %v2067
    %v2069 = vpop.f32.mrb[0].mxu0
    %v2070 = vadd.f32 0.0, %v2069
    %v2071 = vpop.f32.mrb[0].mxu0
    %v2072 = vpop.f32.mrb[0].mxu0
    %2073 = vdwg.mxu0
    %v2074 = vadd.f32 %v1987, %v2027
    %v2075 = vadd.f32 %v1988, %v2029
    %v2076 = vadd.f32 %v1989, %v2068
    %v2077 = vadd.f32 %v1990, %v2070
    %v2078 = vxor.u32 %v2074, 2147483648
    %v2079 = vxor.u32 %v2075, 2147483648
    %v2080 = vxor.u32 %v2076, 2147483648
    %v2081 = vmul.f32 %v2078, 1.442695
    %v2082 = vpow.pop %v2081
    %v2083 = vmul.f32 %v2079, 1.442695
    %v2084 = vpow.pop %v2083
    %v2085 = vmul.f32 %v2080, 1.442695
    %v2086 = vpow.pop %v2085
    %v2087 = vadd.f32 %v2082, 1.0
    %v2088 = vadd.f32 %v2084, 1.0
    %v2089 = vadd.f32 %v2086, 1.0
    %v2090 = vrcp.pop %v2087
    %v2091 = vmul.f32 1.0, %v2090
    %v2092 = vrcp.pop %v2088
    %v2093 = vmul.f32 1.0, %v2092
    %v2094 = vrcp.pop %v2089
    %v2095 = vmul.f32 1.0, %v2094
    %v2096 = vtanh.pop %v2077
    %v2097 = vmul.f32 %v2093, %v1984
    %v2098 = vmul.f32 %v2091, %v2096
    %v2099 = vadd.f32 %v2097, %v2098
    %v2100 = vtanh.pop %v2099
    %v2101 = vmul.f32 %v2095, %v2100
    %v2102 = vld [vmem:[#allocation2 + $0x140] sm:$0xff]
    %v2103 = vld [vmem:[#allocation2 + $0x148] sm:$0xff]
    %v2104 = vld [vmem:[#allocation2 + $0x150] sm:$0xff]
    %v2105 = vld [vmem:[#allocation2 + $0x158] sm:$0xff]
    %v2106 = vpack.c.bf16 %v2101, %v2101
    %2107 = vmatprep.subr.bf16.mxu0 %v766
    %2108 = vmatpush1.bf16.msra.mxu0 %v765
    %2109 = vmatprep.subr.bf16.mxu0 %v770
    %2110 = vmatpush1.bf16.msra.mxu0 %v769
    %2111 = vmatprep.subr.bf16.mxu0 %v774
    %2112 = vmatpush1.bf16.msra.mxu0 %v773
    %2113 = vmatprep.subr.bf16.mxu0 %v778
    %2114 = vmatpush1.bf16.msra.mxu0 %v777
    %2115 = vmatprep.subr.bf16.mxu0 %v782
    %2116 = vmatpush1.bf16.msra.mxu0 %v781
    %2117 = vmatprep.subr.bf16.mxu0 %v786
    %2118 = vmatpush1.bf16.msra.mxu0 %v785
    %2119 = vmatprep.subr.bf16.mxu0 %v790
    %2120 = vmatpush1.bf16.msra.mxu0 %v789
    %2121 = vmatprep.subr.bf16.mxu0 %v794
    %2122 = vmatpush1.bf16.msra.mxu0 %v793
    %2123 = vmatprep.subr.bf16.mxu0 0
    %2124 = vmatpush1.bf16.msra.mxu0 0
    %2125 = vmatprep.subr.bf16.mxu0 0
    %2126 = vmatpush1.bf16.msra.mxu0 0
    %2127 = vmatprep.subr.bf16.mxu0 0
    %2128 = vmatpush1.bf16.msra.mxu0 0
    %2129 = vmatprep.subr.bf16.mxu0 0
    %2130 = vmatpush1.bf16.msra.mxu0 0
    %2131 = vmatprep.subr.bf16.mxu0 0
    %2132 = vmatpush1.bf16.msra.mxu0 0
    %2133 = vmatprep.subr.bf16.mxu0 0
    %2134 = vmatpush1.bf16.msra.mxu0 0
    %2135 = vmatprep.subr.bf16.mxu0 0
    %2136 = vmatpush1.bf16.msra.mxu0 0
    %2137 = vmatprep.subr.bf16.mxu0 0
    %2138 = vmatpush1.bf16.msra.mxu0 0
    %2139 = vmatprep.mubr.bf16.mxu0 0
    %2140 = vmatmul.mubr.bf16.gmra.mrb[0].mxu0 %v2106
    %v2141 = vpop.f32.mrb[0].mxu0
    %v2142 = vadd.f32 0.0, %v2141
    %v2143 = vpop.f32.mrb[0].mxu0
    %v2144 = vadd.f32 0.0, %v2143
    %v2145 = vpop.f32.mrb[0].mxu0
    %v2146 = vpop.f32.mrb[0].mxu0
    %2147 = vdwg.mxu0
    %2148 = vmatprep.subr.bf16.mxu0 %v768
    %2149 = vmatpush1.bf16.msra.mxu0 %v767
    %2150 = vmatprep.subr.bf16.mxu0 %v772
    %2151 = vmatpush1.bf16.msra.mxu0 %v771
    %2152 = vmatprep.subr.bf16.mxu0 %v776
    %2153 = vmatpush1.bf16.msra.mxu0 %v775
    %2154 = vmatprep.subr.bf16.mxu0 %v780
    %2155 = vmatpush1.bf16.msra.mxu0 %v779
    %2156 = vmatprep.subr.bf16.mxu0 %v784
    %2157 = vmatpush1.bf16.msra.mxu0 %v783
    %2158 = vmatprep.subr.bf16.mxu0 %v788
    %2159 = vmatpush1.bf16.msra.mxu0 %v787
    %2160 = vmatprep.subr.bf16.mxu0 %v792
    %2161 = vmatpush1.bf16.msra.mxu0 %v791
    %2162 = vmatprep.subr.bf16.mxu0 %v796
    %2163 = vmatpush1.bf16.msra.mxu0 %v795
    %2164 = vmatprep.subr.bf16.mxu0 0
    %2165 = vmatpush1.bf16.msra.mxu0 0
    %2166 = vmatprep.subr.bf16.mxu0 0
    %2167 = vmatpush1.bf16.msra.mxu0 0
    %2168 = vmatprep.subr.bf16.mxu0 0
    %2169 = vmatpush1.bf16.msra.mxu0 0
    %2170 = vmatprep.subr.bf16.mxu0 0
    %2171 = vmatpush1.bf16.msra.mxu0 0
    %2172 = vmatprep.subr.bf16.mxu0 0
    %2173 = vmatpush1.bf16.msra.mxu0 0
    %2174 = vmatprep.subr.bf16.mxu0 0
    %2175 = vmatpush1.bf16.msra.mxu0 0
    %2176 = vmatprep.subr.bf16.mxu0 0
    %2177 = vmatpush1.bf16.msra.mxu0 0
    %2178 = vmatprep.subr.bf16.mxu0 0
    %2179 = vmatpush1.bf16.msra.mxu0 0
    %2180 = vmatprep.mubr.bf16.mxu0 0
    %2181 = vmatmul.mubr.bf16.gmra.mrb[0].mxu0 %v2106
    %v2182 = vpop.f32.mrb[0].mxu0
    %v2183 = vadd.f32 0.0, %v2182
    %v2184 = vpop.f32.mrb[0].mxu0
    %v2185 = vadd.f32 0.0, %v2184
    %v2186 = vpop.f32.mrb[0].mxu0
    %v2187 = vpop.f32.mrb[0].mxu0
    %2188 = vdwg.mxu0
    %v2189 = vadd.f32 %v2102, %v2142
    %v2190 = vadd.f32 %v2103, %v2144
    %v2191 = vadd.f32 %v2104, %v2183
    %v2192 = vadd.f32 %v2105, %v2185
    %v2193 = vxor.u32 %v2189, 2147483648
    %v2194 = vxor.u32 %v2190, 2147483648
    %v2195 = vxor.u32 %v2191, 2147483648
    %v2196 = vmul.f32 %v2193, 1.442695
    %v2197 = vpow.pop %v2196
    %v2198 = vmul.f32 %v2194, 1.442695
    %v2199 = vpow.pop %v2198
    %v2200 = vmul.f32 %v2195, 1.442695
    %v2201 = vpow.pop %v2200
    %v2202 = vadd.f32 %v2197, 1.0
    %v2203 = vadd.f32 %v2199, 1.0
    %v2204 = vadd.f32 %v2201, 1.0
    %v2205 = vrcp.pop %v2202
    %v2206 = vmul.f32 1.0, %v2205
    %v2207 = vrcp.pop %v2203
    %v2208 = vmul.f32 1.0, %v2207
    %v2209 = vrcp.pop %v2204
    %v2210 = vmul.f32 1.0, %v2209
    %v2211 = vtanh.pop %v2192
    %v2212 = vmul.f32 %v2208, %v2099
    %v2213 = vmul.f32 %v2206, %v2211
    %v2214 = vadd.f32 %v2212, %v2213
    %v2215 = vtanh.pop %v2214
    %v2216 = vmul.f32 %v2210, %v2215
    %v2217 = vld [vmem:[#allocation2 + $0x160] sm:$0xff]
    %v2218 = vld [vmem:[#allocation2 + $0x168] sm:$0xff]
    %v2219 = vld [vmem:[#allocation2 + $0x170] sm:$0xff]
    %v2220 = vld [vmem:[#allocation2 + $0x178] sm:$0xff]
    %v2221 = vpack.c.bf16 %v2216, %v2216
    %2222 = vmatprep.subr.bf16.mxu0 %v766
    %2223 = vmatpush1.bf16.msra.mxu0 %v765
    %2224 = vmatprep.subr.bf16.mxu0 %v770
    %2225 = vmatpush1.bf16.msra.mxu0 %v769
    %2226 = vmatprep.subr.bf16.mxu0 %v774
    %2227 = vmatpush1.bf16.msra.mxu0 %v773
    %2228 = vmatprep.subr.bf16.mxu0 %v778
    %2229 = vmatpush1.bf16.msra.mxu0 %v777
    %2230 = vmatprep.subr.bf16.mxu0 %v782
    %2231 = vmatpush1.bf16.msra.mxu0 %v781
    %2232 = vmatprep.subr.bf16.mxu0 %v786
    %2233 = vmatpush1.bf16.msra.mxu0 %v785
    %2234 = vmatprep.subr.bf16.mxu0 %v790
    %2235 = vmatpush1.bf16.msra.mxu0 %v789
    %2236 = vmatprep.subr.bf16.mxu0 %v794
    %2237 = vmatpush1.bf16.msra.mxu0 %v793
    %2238 = vmatprep.subr.bf16.mxu0 0
    %2239 = vmatpush1.bf16.msra.mxu0 0
    %2240 = vmatprep.subr.bf16.mxu0 0
    %2241 = vmatpush1.bf16.msra.mxu0 0
    %2242 = vmatprep.subr.bf16.mxu0 0
    %2243 = vmatpush1.bf16.msra.mxu0 0
    %2244 = vmatprep.subr.bf16.mxu0 0
    %2245 = vmatpush1.bf16.msra.mxu0 0
    %2246 = vmatprep.subr.bf16.mxu0 0
    %2247 = vmatpush1.bf16.msra.mxu0 0
    %2248 = vmatprep.subr.bf16.mxu0 0
    %2249 = vmatpush1.bf16.msra.mxu0 0
    %2250 = vmatprep.subr.bf16.mxu0 0
    %2251 = vmatpush1.bf16.msra.mxu0 0
    %2252 = vmatprep.subr.bf16.mxu0 0
    %2253 = vmatpush1.bf16.msra.mxu0 0
    %2254 = vmatprep.mubr.bf16.mxu0 0
    %2255 = vmatmul.mubr.bf16.gmra.mrb[0].mxu0 %v2221
    %v2256 = vpop.f32.mrb[0].mxu0
    %v2257 = vadd.f32 0.0, %v2256
    %v2258 = vpop.f32.mrb[0].mxu0
    %v2259 = vadd.f32 0.0, %v2258
    %v2260 = vpop.f32.mrb[0].mxu0
    %v2261 = vpop.f32.mrb[0].mxu0
    %2262 = vdwg.mxu0
    %2263 = vmatprep.subr.bf16.mxu0 %v768
    %2264 = vmatpush1.bf16.msra.mxu0 %v767
    %2265 = vmatprep.subr.bf16.mxu0 %v772
    %2266 = vmatpush1.bf16.msra.mxu0 %v771
    %2267 = vmatprep.subr.bf16.mxu0 %v776
    %2268 = vmatpush1.bf16.msra.mxu0 %v775
    %2269 = vmatprep.subr.bf16.mxu0 %v780
    %2270 = vmatpush1.bf16.msra.mxu0 %v779
    %2271 = vmatprep.subr.bf16.mxu0 %v784
    %2272 = vmatpush1.bf16.msra.mxu0 %v783
    %2273 = vmatprep.subr.bf16.mxu0 %v788
    %2274 = vmatpush1.bf16.msra.mxu0 %v787
    %2275 = vmatprep.subr.bf16.mxu0 %v792
    %2276 = vmatpush1.bf16.msra.mxu0 %v791
    %2277 = vmatprep.subr.bf16.mxu0 %v796
    %2278 = vmatpush1.bf16.msra.mxu0 %v795
    %2279 = vmatprep.subr.bf16.mxu0 0
    %2280 = vmatpush1.bf16.msra.mxu0 0
    %2281 = vmatprep.subr.bf16.mxu0 0
    %2282 = vmatpush1.bf16.msra.mxu0 0
    %2283 = vmatprep.subr.bf16.mxu0 0
    %2284 = vmatpush1.bf16.msra.mxu0 0
    %2285 = vmatprep.subr.bf16.mxu0 0
    %2286 = vmatpush1.bf16.msra.mxu0 0
    %2287 = vmatprep.subr.bf16.mxu0 0
    %2288 = vmatpush1.bf16.msra.mxu0 0
    %2289 = vmatprep.subr.bf16.mxu0 0
    %2290 = vmatpush1.bf16.msra.mxu0 0
    %2291 = vmatprep.subr.bf16.mxu0 0
    %2292 = vmatpush1.bf16.msra.mxu0 0
    %2293 = vmatprep.subr.bf16.mxu0 0
    %2294 = vmatpush1.bf16.msra.mxu0 0
    %2295 = vmatprep.mubr.bf16.mxu0 0
    %2296 = vmatmul.mubr.bf16.gmra.mrb[0].mxu0 %v2221
    %v2297 = vpop.f32.mrb[0].mxu0
    %v2298 = vadd.f32 0.0, %v2297
    %v2299 = vpop.f32.mrb[0].mxu0
    %v2300 = vadd.f32 0.0, %v2299
    %v2301 = vpop.f32.mrb[0].mxu0
    %v2302 = vpop.f32.mrb[0].mxu0
    %2303 = vdwg.mxu0
    %v2304 = vadd.f32 %v2217, %v2257
    %v2305 = vadd.f32 %v2218, %v2259
    %v2306 = vadd.f32 %v2219, %v2298
    %v2307 = vadd.f32 %v2220, %v2300
    %v2308 = vxor.u32 %v2304, 2147483648
    %v2309 = vxor.u32 %v2305, 2147483648
    %v2310 = vxor.u32 %v2306, 2147483648
    %v2311 = vmul.f32 %v2308, 1.442695
    %v2312 = vpow.pop %v2311
    %v2313 = vmul.f32 %v2309, 1.442695
    %v2314 = vpow.pop %v2313
    %v2315 = vmul.f32 %v2310, 1.442695
    %v2316 = vpow.pop %v2315
    %v2317 = vadd.f32 %v2312, 1.0
    %v2318 = vadd.f32 %v2314, 1.0
    %v2319 = vadd.f32 %v2316, 1.0
    %v2320 = vrcp.pop %v2317
    %v2321 = vmul.f32 1.0, %v2320
    %v2322 = vrcp.pop %v2318
    %v2323 = vmul.f32 1.0, %v2322
    %v2324 = vrcp.pop %v2319
    %v2325 = vmul.f32 1.0, %v2324
    %v2326 = vtanh.pop %v2307
    %v2327 = vmul.f32 %v2323, %v2214
    %v2328 = vmul.f32 %v2321, %v2326
    %v2329 = vadd.f32 %v2327, %v2328
    %v2330 = vtanh.pop %v2329
    %v2331 = vmul.f32 %v2325, %v2330
    %v2332 = vld [vmem:[%s6] sm:$0x1]
    %v2334 = vlaneseq
    %v2335 = vshrl.u32 %v2334, 7
    %v2336 = vsub.s32 0, %v2335
    %v2337 = vrot.slane %v2332, %v2336
    %v2339 = vmul.f32 %v2331, %v2337
    %2340 = vadd.xlane.f32.xlu0 %v2339
    %v2341 = vpop.xlane.xlu0 %2340
    %v2342 = vld [vmem:[#allocation3] sm:$0x1]
    %v2344 = vlaneseq
    %v2345 = vshrl.u32 %v2344, 7
    %v2346 = vsub.s32 0, %v2345
    %v2347 = vrot.slane %v2342, %v2346
    %v2349 = vadd.f32 %v2341, %v2347
    %vm2350 = vcmask 7168
    %2351 = vst.msk [vmem:[%s8] sm:$0xff] %vm2350, %v2349
    // Predicated region
    $region42: #{tpu_custom_call.1} parent=1 // pred_check
      _
    $region43: #{tpu_custom_call.1} parent=1 // pred_check_branch
      %2353 = sbr.rel (0) target = $region45
    $region44: #{tpu_custom_call.1} parent=1 // pred_region
      _
    $region45: #{tpu_custom_call.1} parent=1 // pred_fallthru
      _
    // Predicated region
    $region46: #{tpu_custom_call.1} parent=1 // pred_check
      _
    $region47: #{tpu_custom_call.1} parent=1 // pred_check_branch
      %2355 = sbr.rel (0) target = $region49
    $region48: #{tpu_custom_call.1} parent=1 // pred_region
      _
    $region49: #{tpu_custom_call.1} parent=1 // pred_fallthru
      _
    %2356 = vsyncpa [#allocation5], 1
    %2357 = vsyncpa [#allocation7], 1

</llo_original>
